<compile_context>
chip_gen: v7x
topology: tpu7x:2x2x1
jax: 0.10.0
libtpu: 0.0.40
codegen_flags: <defaults>
</compile_context>

<pallas_src>
import jax
import jax.numpy as jnp
import numpy as np
from jax import lax
from jax.experimental import pallas as pl
from jax.experimental.pallas import tpu as pltpu


def retain_kernel(x_ref,
                  wi_ref,            # (D, Dg) fused input->gate weights [r|z|n|0pad], pre-transposed
                  wh_ref,            # (D, Dg) fused hidden->gate weights [r|z|n|0pad], pre-transposed
                  bi_ref,            # (1, Dg) fused input-side biases (r/z have b_hh folded in)
                  bhn_ref,           # (1, D)  hidden bias of the n gate (stays inside r*(...))
                  wb_t_ref, bb_ref,  # (D, D), (1, D)  beta_li
                  wo_t_ref, bo_ref,  # (D, O), (1, O)  output Linear
                  out_ref):          # (B, O)
    T, B, D = x_ref.shape
    Dg = wi_ref.shape[1]
    x = x_ref[...]

    # ---- Hoisted, fused input projection: ONE lane-dense (T*B, D) @ (D, Dg) matmul ----
    gi = (jnp.dot(x.reshape(T * B, D), wi_ref[...],
                  preferred_element_type=jnp.float32)
          + bi_ref[...]).reshape(T, B, Dg)

    wh = wh_ref[...]
    bhn = jnp.broadcast_to(bhn_ref[...], (B, D))        # hoisted (JAX does not CSE broadcasts)

    # ---- Sequential GRU recurrence (PyTorch gate order r, z, n), fully unrolled ----
    # One fused hidden matmul per step; gate split is static lane slicing (XLU).
    # State (gi, h, history) stays value/vreg-resident: no VMEM scratch round trips
    # on the serial critical path.
    h = jnp.zeros((B, D), jnp.float32)
    hs = []
    for t in range(T):                                   # T is small & static
        gh = jnp.dot(h, wh, preferred_element_type=jnp.float32)   # (B, Dg), single MXU op
        gi_t = gi[t]
        r = jax.nn.sigmoid(gi_t[:, 0:D] + gh[:, 0:D])
        z = jax.nn.sigmoid(gi_t[:, D:2 * D] + gh[:, D:2 * D])
        n = jnp.tanh(gi_t[:, 2 * D:3 * D] + r * (gh[:, 2 * D:3 * D] + bhn))
        h = (1.0 - z) * n + z * h
        hs.append(h)
    h_all = jnp.stack(hs)                                # (T, B, D)

    # ---- Batched epilogue: beta branch + context reduction + output Linear ----
    # attn_g = softmax over a size-1 last axis == 1.0 exactly -> alpha branch dropped.
    attn_h = jnp.tanh(jnp.dot(h_all.reshape(T * B, D), wb_t_ref[...],
                              preferred_element_type=jnp.float32) + bb_ref[...])
    ctx = jnp.sum(attn_h.reshape(T, B, D) * x, axis=0)   # (B, D)
    out_ref[...] = (jnp.dot(ctx, wo_t_ref[...], preferred_element_type=jnp.float32)
                    + bo_ref[...])


def retain_forward(x, params):
    """x: (B, T, D) float32, batch-first like the PyTorch module."""
    B, T, D = x.shape
    O = params["wo"].shape[0]
    Bp = int(np.ceil(B / 8.0)) * 8                       # pad batch to a sublane multiple

    x_tm = jnp.transpose(x, (1, 0, 2))                   # (T, B, D) time-major for the kernel
    if Bp != B:
        x_tm = jnp.pad(x_tm, ((0, 0), (0, Bp - B), (0, 0)))

    w_ih, w_hh = params["w_ih"], params["w_hh"]
    b_ih, b_hh = params["b_ih"], params["b_hh"]

    # Fused gate weights (PyTorch order r, z, n), pre-transposed for act @ W^T,
    # zero-padded on the lane axis to a multiple of 128 for lane-dense MXU output.
    Dg = int(np.ceil(3 * D / 128.0)) * 128
    pad = Dg - 3 * D
    wi = w_ih.T                                           # (D, 3D), cols [r|z|n]
    wh = w_hh.T                                           # (D, 3D), cols [r|z|n]
    # Fold biases: r/z gates take b_ih + b_hh; n gate keeps only b_ih here
    # (b_hh of n stays inside the r*(...) term per the GRU definition).
    bi = jnp.concatenate([b_ih[0:D] + b_hh[0:D],
                          b_ih[D:2 * D] + b_hh[D:2 * D],
                          b_ih[2 * D:3 * D]], axis=0).reshape(1, 3 * D)
    if pad > 0:
        wi = jnp.pad(wi, ((0, 0), (0, pad)))
        wh = jnp.pad(wh, ((0, 0), (0, pad)))
        bi = jnp.pad(bi, ((0, 0), (0, pad)))
    bhn = b_hh[2 * D:3 * D].reshape(1, D)

    args = (
        x_tm,
        wi, wh, bi, bhn,
        params["wb"].T, params["bb"].reshape(1, D),
        params["wo"].T, params["bo"].reshape(1, O),
    )

    out_p = pl.pallas_call(
        retain_kernel,
        out_shape=jax.ShapeDtypeStruct((Bp, O), jnp.float32),
        in_specs=[pl.BlockSpec(memory_space=pltpu.MemorySpace.VMEM)] * len(args),
        out_specs=pl.BlockSpec(memory_space=pltpu.MemorySpace.VMEM),
    )(*args)
    return out_p[:B]


def make_params(key, input_dim, output_dim):
    """Deterministic synthetic parameters with the same shapes as the torch module
    (hidden_dim == input_dim per the __init__ override, bi_direction=False)."""
    D, O = input_dim, output_dim
    ks = jax.random.split(key, 10)
    scale = 1.0 / np.sqrt(D)
    u = lambda k, shape: jax.random.uniform(k, shape, jnp.float32, -scale, scale)
    return {
        # GRU (num_layers=1, unidirectional): weight_ih_l0 (3D, D), weight_hh_l0 (3D, D)
        "w_ih": u(ks[0], (3 * D, D)),
        "w_hh": u(ks[1], (3 * D, D)),
        "b_ih": u(ks[2], (3 * D,)),
        "b_hh": u(ks[3], (3 * D,)),
        # alpha_li: Linear(D, 1)  (kept for the reference; softmax over size-1 dim == 1.0)
        "wa": u(ks[4], (1, D)),
        "ba": u(ks[5], (1,)),
        # beta_li: Linear(D, D)
        "wb": u(ks[6], (D, D)),
        "bb": u(ks[7], (D,)),
        # output: Linear(D, O)
        "wo": u(ks[8], (O, D)),
        "bo": u(ks[9], (O,)),
    }


def retain_reference(x, p):
    """Pure-JAX reference mirroring the PyTorch forward, for validation."""
    B, T, D = x.shape

    def gru_step(h, x_t):
        gi = x_t @ p["w_ih"].T + p["b_ih"]
        gh = h @ p["w_hh"].T + p["b_hh"]
        r = jax.nn.sigmoid(gi[:, :D] + gh[:, :D])
        z = jax.nn.sigmoid(gi[:, D:2 * D] + gh[:, D:2 * D])
        n = jnp.tanh(gi[:, 2 * D:] + r * gh[:, 2 * D:])
        h_new = (1.0 - z) * n + z * h
        return h_new, h_new

    _, hs = lax.scan(gru_step, jnp.zeros((B, D), jnp.float32),
                     jnp.transpose(x, (1, 0, 2)))
    g = jnp.transpose(hs, (1, 0, 2))                 # (B, T, D); h == g
    g_li = g @ p["wa"].T + p["ba"]                   # (B, T, 1)
    attn_g = jax.nn.softmax(g_li, axis=-1)           # identically 1.0
    h_li = g @ p["wb"].T + p["bb"]                   # (B, T, D)
    attn_h = jnp.tanh(h_li)
    c = jnp.sum(attn_g * attn_h * x, axis=1)         # (B, D)
    return c @ p["wo"].T + p["bo"]                   # (B, O)


if __name__ == "__main__":
    B, T, D, O = 4, 8, 32, 16                        # batch, seq, input_dim(=hidden), output_dim
    key = jax.random.PRNGKey(0)
    kx, kp = jax.random.split(key)
    x = jax.random.normal(kx, (B, T, D), jnp.float32)
    params = make_params(kp, D, O)

    out = jax.block_until_ready(retain_forward(x, params))
    ref = jax.block_until_ready(retain_reference(x, params))
    np.testing.assert_allclose(np.asarray(out), np.asarray(ref), rtol=1e-4, atol=1e-4)

    print("KERNEL_OK")
</pallas_src>

<mosaic_0001>
module attributes {stable_mosaic.version = 11 : i64} {
  func.func @retain_kernel(%arg0: memref<8x8x32xf32, #tpu.memory_space<vmem>>, %arg1: memref<32x128xf32, #tpu.memory_space<vmem>>, %arg2: memref<32x128xf32, #tpu.memory_space<vmem>>, %arg3: memref<1x128xf32, #tpu.memory_space<vmem>>, %arg4: memref<1x32xf32, #tpu.memory_space<vmem>>, %arg5: memref<32x32xf32, #tpu.memory_space<vmem>>, %arg6: memref<1x32xf32, #tpu.memory_space<vmem>>, %arg7: memref<32x16xf32, #tpu.memory_space<vmem>>, %arg8: memref<1x16xf32, #tpu.memory_space<vmem>>, %arg9: memref<8x16xf32, #tpu.memory_space<vmem>>) attributes {dimension_semantics = [], scalar_prefetch = 0 : i64, scratch_operands = 0 : i64, tpu.core_type = #tpu.core_type<tc>} {
    %c0 = arith.constant 0 : index
    %c0_0 = arith.constant 0 : index
    %c0_1 = arith.constant 0 : index
    %0 = vector.load %arg0[%c0, %c0_0, %c0_1] : memref<8x8x32xf32, #tpu.memory_space<vmem>>, vector<8x8x32xf32>
    %1 = vector.shape_cast %0 : vector<8x8x32xf32> to vector<64x32xf32>
    %c0_2 = arith.constant 0 : index
    %c0_3 = arith.constant 0 : index
    %2 = vector.load %arg1[%c0_2, %c0_3] : memref<32x128xf32, #tpu.memory_space<vmem>>, vector<32x128xf32>
    %cst = arith.constant dense<0.000000e+00> : vector<64x128xf32>
    %3 = tpu.matmul %1, %2, %cst {dimension_numbers = #tpu.dot_dimension_numbers<[1], [0], [0], [1], [0, 0, 1, 1], [], []>} : vector<64x32xf32>, vector<32x128xf32>, vector<64x128xf32> -> vector<64x128xf32>
    %c0_4 = arith.constant 0 : index
    %c0_5 = arith.constant 0 : index
    %4 = vector.load %arg3[%c0_4, %c0_5] : memref<1x128xf32, #tpu.memory_space<vmem>>, vector<1x128xf32>
    %5 = vector.broadcast %4 : vector<1x128xf32> to vector<64x128xf32>
    %6 = arith.addf %3, %5 : vector<64x128xf32>
    %7 = vector.shape_cast %6 : vector<64x128xf32> to vector<8x8x128xf32>
    %c0_6 = arith.constant 0 : index
    %c0_7 = arith.constant 0 : index
    %8 = vector.load %arg2[%c0_6, %c0_7] : memref<32x128xf32, #tpu.memory_space<vmem>>, vector<32x128xf32>
    %c0_8 = arith.constant 0 : index
    %c0_9 = arith.constant 0 : index
    %9 = vector.load %arg4[%c0_8, %c0_9] : memref<1x32xf32, #tpu.memory_space<vmem>>, vector<1x32xf32>
    %10 = vector.shape_cast %9 : vector<1x32xf32> to vector<1x32xf32>
    %11 = vector.broadcast %10 : vector<1x32xf32> to vector<8x32xf32>
    %cst_10 = arith.constant 0.000000e+00 : f32
    %12 = vector.broadcast %cst_10 : f32 to vector<8x32xf32>
    %cst_11 = arith.constant dense<0.000000e+00> : vector<8x128xf32>
    %13 = tpu.matmul %12, %8, %cst_11 {dimension_numbers = #tpu.dot_dimension_numbers<[1], [0], [0], [1], [0, 0, 1, 1], [], []>} : vector<8x32xf32>, vector<32x128xf32>, vector<8x128xf32> -> vector<8x128xf32>
    %14 = vector.extract_strided_slice %7 {offsets = [0, 0, 0], sizes = [1, 8, 128], strides = [1, 1, 1]} : vector<8x8x128xf32> to vector<1x8x128xf32>
    %15 = vector.shape_cast %14 : vector<1x8x128xf32> to vector<8x128xf32>
    %16 = vector.extract_strided_slice %15 {offsets = [0, 0], sizes = [8, 32], strides = [1, 1]} : vector<8x128xf32> to vector<8x32xf32>
    %17 = vector.extract_strided_slice %13 {offsets = [0, 0], sizes = [8, 32], strides = [1, 1]} : vector<8x128xf32> to vector<8x32xf32>
    %18 = arith.addf %16, %17 : vector<8x32xf32>
    %19 = arith.negf %18 : vector<8x32xf32>
    %20 = math.exp %19 : vector<8x32xf32>
    %cst_12 = arith.constant 1.000000e+00 : f32
    %21 = vector.broadcast %cst_12 : f32 to vector<8x32xf32>
    %22 = arith.addf %21, %20 : vector<8x32xf32>
    %23 = arith.divf %21, %22 : vector<8x32xf32>
    %24 = vector.extract_strided_slice %15 {offsets = [0, 32], sizes = [8, 32], strides = [1, 1]} : vector<8x128xf32> to vector<8x32xf32>
    %25 = vector.extract_strided_slice %13 {offsets = [0, 32], sizes = [8, 32], strides = [1, 1]} : vector<8x128xf32> to vector<8x32xf32>
    %26 = arith.addf %24, %25 : vector<8x32xf32>
    %27 = arith.negf %26 : vector<8x32xf32>
    %28 = math.exp %27 : vector<8x32xf32>
    %cst_13 = arith.constant 1.000000e+00 : f32
    %29 = vector.broadcast %cst_13 : f32 to vector<8x32xf32>
    %30 = arith.addf %29, %28 : vector<8x32xf32>
    %31 = arith.divf %29, %30 : vector<8x32xf32>
    %32 = vector.extract_strided_slice %15 {offsets = [0, 64], sizes = [8, 32], strides = [1, 1]} : vector<8x128xf32> to vector<8x32xf32>
    %33 = vector.extract_strided_slice %13 {offsets = [0, 64], sizes = [8, 32], strides = [1, 1]} : vector<8x128xf32> to vector<8x32xf32>
    %34 = arith.addf %33, %11 : vector<8x32xf32>
    %35 = arith.mulf %23, %34 : vector<8x32xf32>
    %36 = arith.addf %32, %35 : vector<8x32xf32>
    %37 = math.tanh %36 : vector<8x32xf32>
    %cst_14 = arith.constant 1.000000e+00 : f32
    %38 = vector.broadcast %cst_14 : f32 to vector<8x32xf32>
    %39 = arith.subf %38, %31 : vector<8x32xf32>
    %40 = arith.mulf %39, %37 : vector<8x32xf32>
    %41 = arith.mulf %31, %12 : vector<8x32xf32>
    %42 = arith.addf %40, %41 : vector<8x32xf32>
    %cst_15 = arith.constant dense<0.000000e+00> : vector<8x128xf32>
    %43 = tpu.matmul %42, %8, %cst_15 {dimension_numbers = #tpu.dot_dimension_numbers<[1], [0], [0], [1], [0, 0, 1, 1], [], []>} : vector<8x32xf32>, vector<32x128xf32>, vector<8x128xf32> -> vector<8x128xf32>
    %44 = vector.extract_strided_slice %7 {offsets = [1, 0, 0], sizes = [1, 8, 128], strides = [1, 1, 1]} : vector<8x8x128xf32> to vector<1x8x128xf32>
    %45 = vector.shape_cast %44 : vector<1x8x128xf32> to vector<8x128xf32>
    %46 = vector.extract_strided_slice %45 {offsets = [0, 0], sizes = [8, 32], strides = [1, 1]} : vector<8x128xf32> to vector<8x32xf32>
    %47 = vector.extract_strided_slice %43 {offsets = [0, 0], sizes = [8, 32], strides = [1, 1]} : vector<8x128xf32> to vector<8x32xf32>
    %48 = arith.addf %46, %47 : vector<8x32xf32>
    %49 = arith.negf %48 : vector<8x32xf32>
    %50 = math.exp %49 : vector<8x32xf32>
    %cst_16 = arith.constant 1.000000e+00 : f32
    %51 = vector.broadcast %cst_16 : f32 to vector<8x32xf32>
    %52 = arith.addf %51, %50 : vector<8x32xf32>
    %53 = arith.divf %51, %52 : vector<8x32xf32>
    %54 = vector.extract_strided_slice %45 {offsets = [0, 32], sizes = [8, 32], strides = [1, 1]} : vector<8x128xf32> to vector<8x32xf32>
    %55 = vector.extract_strided_slice %43 {offsets = [0, 32], sizes = [8, 32], strides = [1, 1]} : vector<8x128xf32> to vector<8x32xf32>
    %56 = arith.addf %54, %55 : vector<8x32xf32>
    %57 = arith.negf %56 : vector<8x32xf32>
    %58 = math.exp %57 : vector<8x32xf32>
    %cst_17 = arith.constant 1.000000e+00 : f32
    %59 = vector.broadcast %cst_17 : f32 to vector<8x32xf32>
    %60 = arith.addf %59, %58 : vector<8x32xf32>
    %61 = arith.divf %59, %60 : vector<8x32xf32>
    %62 = vector.extract_strided_slice %45 {offsets = [0, 64], sizes = [8, 32], strides = [1, 1]} : vector<8x128xf32> to vector<8x32xf32>
    %63 = vector.extract_strided_slice %43 {offsets = [0, 64], sizes = [8, 32], strides = [1, 1]} : vector<8x128xf32> to vector<8x32xf32>
    %64 = arith.addf %63, %11 : vector<8x32xf32>
    %65 = arith.mulf %53, %64 : vector<8x32xf32>
    %66 = arith.addf %62, %65 : vector<8x32xf32>
    %67 = math.tanh %66 : vector<8x32xf32>
    %cst_18 = arith.constant 1.000000e+00 : f32
    %68 = vector.broadcast %cst_18 : f32 to vector<8x32xf32>
    %69 = arith.subf %68, %61 : vector<8x32xf32>
    %70 = arith.mulf %69, %67 : vector<8x32xf32>
    %71 = arith.mulf %61, %42 : vector<8x32xf32>
    %72 = arith.addf %70, %71 : vector<8x32xf32>
    %cst_19 = arith.constant dense<0.000000e+00> : vector<8x128xf32>
    %73 = tpu.matmul %72, %8, %cst_19 {dimension_numbers = #tpu.dot_dimension_numbers<[1], [0], [0], [1], [0, 0, 1, 1], [], []>} : vector<8x32xf32>, vector<32x128xf32>, vector<8x128xf32> -> vector<8x128xf32>
    %74 = vector.extract_strided_slice %7 {offsets = [2, 0, 0], sizes = [1, 8, 128], strides = [1, 1, 1]} : vector<8x8x128xf32> to vector<1x8x128xf32>
    %75 = vector.shape_cast %74 : vector<1x8x128xf32> to vector<8x128xf32>
    %76 = vector.extract_strided_slice %75 {offsets = [0, 0], sizes = [8, 32], strides = [1, 1]} : vector<8x128xf32> to vector<8x32xf32>
    %77 = vector.extract_strided_slice %73 {offsets = [0, 0], sizes = [8, 32], strides = [1, 1]} : vector<8x128xf32> to vector<8x32xf32>
    %78 = arith.addf %76, %77 : vector<8x32xf32>
    %79 = arith.negf %78 : vector<8x32xf32>
    %80 = math.exp %79 : vector<8x32xf32>
    %cst_20 = arith.constant 1.000000e+00 : f32
    %81 = vector.broadcast %cst_20 : f32 to vector<8x32xf32>
    %82 = arith.addf %81, %80 : vector<8x32xf32>
    %83 = arith.divf %81, %82 : vector<8x32xf32>
    %84 = vector.extract_strided_slice %75 {offsets = [0, 32], sizes = [8, 32], strides = [1, 1]} : vector<8x128xf32> to vector<8x32xf32>
    %85 = vector.extract_strided_slice %73 {offsets = [0, 32], sizes = [8, 32], strides = [1, 1]} : vector<8x128xf32> to vector<8x32xf32>
    %86 = arith.addf %84, %85 : vector<8x32xf32>
    %87 = arith.negf %86 : vector<8x32xf32>
    %88 = math.exp %87 : vector<8x32xf32>
    %cst_21 = arith.constant 1.000000e+00 : f32
    %89 = vector.broadcast %cst_21 : f32 to vector<8x32xf32>
    %90 = arith.addf %89, %88 : vector<8x32xf32>
    %91 = arith.divf %89, %90 : vector<8x32xf32>
    %92 = vector.extract_strided_slice %75 {offsets = [0, 64], sizes = [8, 32], strides = [1, 1]} : vector<8x128xf32> to vector<8x32xf32>
    %93 = vector.extract_strided_slice %73 {offsets = [0, 64], sizes = [8, 32], strides = [1, 1]} : vector<8x128xf32> to vector<8x32xf32>
    %94 = arith.addf %93, %11 : vector<8x32xf32>
    %95 = arith.mulf %83, %94 : vector<8x32xf32>
    %96 = arith.addf %92, %95 : vector<8x32xf32>
    %97 = math.tanh %96 : vector<8x32xf32>
    %cst_22 = arith.constant 1.000000e+00 : f32
    %98 = vector.broadcast %cst_22 : f32 to vector<8x32xf32>
    %99 = arith.subf %98, %91 : vector<8x32xf32>
    %100 = arith.mulf %99, %97 : vector<8x32xf32>
    %101 = arith.mulf %91, %72 : vector<8x32xf32>
    %102 = arith.addf %100, %101 : vector<8x32xf32>
    %cst_23 = arith.constant dense<0.000000e+00> : vector<8x128xf32>
    %103 = tpu.matmul %102, %8, %cst_23 {dimension_numbers = #tpu.dot_dimension_numbers<[1], [0], [0], [1], [0, 0, 1, 1], [], []>} : vector<8x32xf32>, vector<32x128xf32>, vector<8x128xf32> -> vector<8x128xf32>
    %104 = vector.extract_strided_slice %7 {offsets = [3, 0, 0], sizes = [1, 8, 128], strides = [1, 1, 1]} : vector<8x8x128xf32> to vector<1x8x128xf32>
    %105 = vector.shape_cast %104 : vector<1x8x128xf32> to vector<8x128xf32>
    %106 = vector.extract_strided_slice %105 {offsets = [0, 0], sizes = [8, 32], strides = [1, 1]} : vector<8x128xf32> to vector<8x32xf32>
    %107 = vector.extract_strided_slice %103 {offsets = [0, 0], sizes = [8, 32], strides = [1, 1]} : vector<8x128xf32> to vector<8x32xf32>
    %108 = arith.addf %106, %107 : vector<8x32xf32>
    %109 = arith.negf %108 : vector<8x32xf32>
    %110 = math.exp %109 : vector<8x32xf32>
    %cst_24 = arith.constant 1.000000e+00 : f32
    %111 = vector.broadcast %cst_24 : f32 to vector<8x32xf32>
    %112 = arith.addf %111, %110 : vector<8x32xf32>
    %113 = arith.divf %111, %112 : vector<8x32xf32>
    %114 = vector.extract_strided_slice %105 {offsets = [0, 32], sizes = [8, 32], strides = [1, 1]} : vector<8x128xf32> to vector<8x32xf32>
    %115 = vector.extract_strided_slice %103 {offsets = [0, 32], sizes = [8, 32], strides = [1, 1]} : vector<8x128xf32> to vector<8x32xf32>
    %116 = arith.addf %114, %115 : vector<8x32xf32>
    %117 = arith.negf %116 : vector<8x32xf32>
    %118 = math.exp %117 : vector<8x32xf32>
    %cst_25 = arith.constant 1.000000e+00 : f32
    %119 = vector.broadcast %cst_25 : f32 to vector<8x32xf32>
    %120 = arith.addf %119, %118 : vector<8x32xf32>
    %121 = arith.divf %119, %120 : vector<8x32xf32>
    %122 = vector.extract_strided_slice %105 {offsets = [0, 64], sizes = [8, 32], strides = [1, 1]} : vector<8x128xf32> to vector<8x32xf32>
    %123 = vector.extract_strided_slice %103 {offsets = [0, 64], sizes = [8, 32], strides = [1, 1]} : vector<8x128xf32> to vector<8x32xf32>
    %124 = arith.addf %123, %11 : vector<8x32xf32>
    %125 = arith.mulf %113, %124 : vector<8x32xf32>
    %126 = arith.addf %122, %125 : vector<8x32xf32>
    %127 = math.tanh %126 : vector<8x32xf32>
    %cst_26 = arith.constant 1.000000e+00 : f32
    %128 = vector.broadcast %cst_26 : f32 to vector<8x32xf32>
    %129 = arith.subf %128, %121 : vector<8x32xf32>
    %130 = arith.mulf %129, %127 : vector<8x32xf32>
    %131 = arith.mulf %121, %102 : vector<8x32xf32>
    %132 = arith.addf %130, %131 : vector<8x32xf32>
    %cst_27 = arith.constant dense<0.000000e+00> : vector<8x128xf32>
    %133 = tpu.matmul %132, %8, %cst_27 {dimension_numbers = #tpu.dot_dimension_numbers<[1], [0], [0], [1], [0, 0, 1, 1], [], []>} : vector<8x32xf32>, vector<32x128xf32>, vector<8x128xf32> -> vector<8x128xf32>
    %134 = vector.extract_strided_slice %7 {offsets = [4, 0, 0], sizes = [1, 8, 128], strides = [1, 1, 1]} : vector<8x8x128xf32> to vector<1x8x128xf32>
    %135 = vector.shape_cast %134 : vector<1x8x128xf32> to vector<8x128xf32>
    %136 = vector.extract_strided_slice %135 {offsets = [0, 0], sizes = [8, 32], strides = [1, 1]} : vector<8x128xf32> to vector<8x32xf32>
    %137 = vector.extract_strided_slice %133 {offsets = [0, 0], sizes = [8, 32], strides = [1, 1]} : vector<8x128xf32> to vector<8x32xf32>
    %138 = arith.addf %136, %137 : vector<8x32xf32>
    %139 = arith.negf %138 : vector<8x32xf32>
    %140 = math.exp %139 : vector<8x32xf32>
    %cst_28 = arith.constant 1.000000e+00 : f32
    %141 = vector.broadcast %cst_28 : f32 to vector<8x32xf32>
    %142 = arith.addf %141, %140 : vector<8x32xf32>
    %143 = arith.divf %141, %142 : vector<8x32xf32>
    %144 = vector.extract_strided_slice %135 {offsets = [0, 32], sizes = [8, 32], strides = [1, 1]} : vector<8x128xf32> to vector<8x32xf32>
    %145 = vector.extract_strided_slice %133 {offsets = [0, 32], sizes = [8, 32], strides = [1, 1]} : vector<8x128xf32> to vector<8x32xf32>
    %146 = arith.addf %144, %145 : vector<8x32xf32>
    %147 = arith.negf %146 : vector<8x32xf32>
    %148 = math.exp %147 : vector<8x32xf32>
    %cst_29 = arith.constant 1.000000e+00 : f32
    %149 = vector.broadcast %cst_29 : f32 to vector<8x32xf32>
    %150 = arith.addf %149, %148 : vector<8x32xf32>
    %151 = arith.divf %149, %150 : vector<8x32xf32>
    %152 = vector.extract_strided_slice %135 {offsets = [0, 64], sizes = [8, 32], strides = [1, 1]} : vector<8x128xf32> to vector<8x32xf32>
    %153 = vector.extract_strided_slice %133 {offsets = [0, 64], sizes = [8, 32], strides = [1, 1]} : vector<8x128xf32> to vector<8x32xf32>
    %154 = arith.addf %153, %11 : vector<8x32xf32>
    %155 = arith.mulf %143, %154 : vector<8x32xf32>
    %156 = arith.addf %152, %155 : vector<8x32xf32>
    %157 = math.tanh %156 : vector<8x32xf32>
    %cst_30 = arith.constant 1.000000e+00 : f32
    %158 = vector.broadcast %cst_30 : f32 to vector<8x32xf32>
    %159 = arith.subf %158, %151 : vector<8x32xf32>
    %160 = arith.mulf %159, %157 : vector<8x32xf32>
    %161 = arith.mulf %151, %132 : vector<8x32xf32>
    %162 = arith.addf %160, %161 : vector<8x32xf32>
    %cst_31 = arith.constant dense<0.000000e+00> : vector<8x128xf32>
    %163 = tpu.matmul %162, %8, %cst_31 {dimension_numbers = #tpu.dot_dimension_numbers<[1], [0], [0], [1], [0, 0, 1, 1], [], []>} : vector<8x32xf32>, vector<32x128xf32>, vector<8x128xf32> -> vector<8x128xf32>
    %164 = vector.extract_strided_slice %7 {offsets = [5, 0, 0], sizes = [1, 8, 128], strides = [1, 1, 1]} : vector<8x8x128xf32> to vector<1x8x128xf32>
    %165 = vector.shape_cast %164 : vector<1x8x128xf32> to vector<8x128xf32>
    %166 = vector.extract_strided_slice %165 {offsets = [0, 0], sizes = [8, 32], strides = [1, 1]} : vector<8x128xf32> to vector<8x32xf32>
    %167 = vector.extract_strided_slice %163 {offsets = [0, 0], sizes = [8, 32], strides = [1, 1]} : vector<8x128xf32> to vector<8x32xf32>
    %168 = arith.addf %166, %167 : vector<8x32xf32>
    %169 = arith.negf %168 : vector<8x32xf32>
    %170 = math.exp %169 : vector<8x32xf32>
    %cst_32 = arith.constant 1.000000e+00 : f32
    %171 = vector.broadcast %cst_32 : f32 to vector<8x32xf32>
    %172 = arith.addf %171, %170 : vector<8x32xf32>
    %173 = arith.divf %171, %172 : vector<8x32xf32>
    %174 = vector.extract_strided_slice %165 {offsets = [0, 32], sizes = [8, 32], strides = [1, 1]} : vector<8x128xf32> to vector<8x32xf32>
    %175 = vector.extract_strided_slice %163 {offsets = [0, 32], sizes = [8, 32], strides = [1, 1]} : vector<8x128xf32> to vector<8x32xf32>
    %176 = arith.addf %174, %175 : vector<8x32xf32>
    %177 = arith.negf %176 : vector<8x32xf32>
    %178 = math.exp %177 : vector<8x32xf32>
    %cst_33 = arith.constant 1.000000e+00 : f32
    %179 = vector.broadcast %cst_33 : f32 to vector<8x32xf32>
    %180 = arith.addf %179, %178 : vector<8x32xf32>
    %181 = arith.divf %179, %180 : vector<8x32xf32>
    %182 = vector.extract_strided_slice %165 {offsets = [0, 64], sizes = [8, 32], strides = [1, 1]} : vector<8x128xf32> to vector<8x32xf32>
    %183 = vector.extract_strided_slice %163 {offsets = [0, 64], sizes = [8, 32], strides = [1, 1]} : vector<8x128xf32> to vector<8x32xf32>
    %184 = arith.addf %183, %11 : vector<8x32xf32>
    %185 = arith.mulf %173, %184 : vector<8x32xf32>
    %186 = arith.addf %182, %185 : vector<8x32xf32>
    %187 = math.tanh %186 : vector<8x32xf32>
    %cst_34 = arith.constant 1.000000e+00 : f32
    %188 = vector.broadcast %cst_34 : f32 to vector<8x32xf32>
    %189 = arith.subf %188, %181 : vector<8x32xf32>
    %190 = arith.mulf %189, %187 : vector<8x32xf32>
    %191 = arith.mulf %181, %162 : vector<8x32xf32>
    %192 = arith.addf %190, %191 : vector<8x32xf32>
    %cst_35 = arith.constant dense<0.000000e+00> : vector<8x128xf32>
    %193 = tpu.matmul %192, %8, %cst_35 {dimension_numbers = #tpu.dot_dimension_numbers<[1], [0], [0], [1], [0, 0, 1, 1], [], []>} : vector<8x32xf32>, vector<32x128xf32>, vector<8x128xf32> -> vector<8x128xf32>
    %194 = vector.extract_strided_slice %7 {offsets = [6, 0, 0], sizes = [1, 8, 128], strides = [1, 1, 1]} : vector<8x8x128xf32> to vector<1x8x128xf32>
    %195 = vector.shape_cast %194 : vector<1x8x128xf32> to vector<8x128xf32>
    %196 = vector.extract_strided_slice %195 {offsets = [0, 0], sizes = [8, 32], strides = [1, 1]} : vector<8x128xf32> to vector<8x32xf32>
    %197 = vector.extract_strided_slice %193 {offsets = [0, 0], sizes = [8, 32], strides = [1, 1]} : vector<8x128xf32> to vector<8x32xf32>
    %198 = arith.addf %196, %197 : vector<8x32xf32>
    %199 = arith.negf %198 : vector<8x32xf32>
    %200 = math.exp %199 : vector<8x32xf32>
    %cst_36 = arith.constant 1.000000e+00 : f32
    %201 = vector.broadcast %cst_36 : f32 to vector<8x32xf32>
    %202 = arith.addf %201, %200 : vector<8x32xf32>
    %203 = arith.divf %201, %202 : vector<8x32xf32>
    %204 = vector.extract_strided_slice %195 {offsets = [0, 32], sizes = [8, 32], strides = [1, 1]} : vector<8x128xf32> to vector<8x32xf32>
    %205 = vector.extract_strided_slice %193 {offsets = [0, 32], sizes = [8, 32], strides = [1, 1]} : vector<8x128xf32> to vector<8x32xf32>
    %206 = arith.addf %204, %205 : vector<8x32xf32>
    %207 = arith.negf %206 : vector<8x32xf32>
    %208 = math.exp %207 : vector<8x32xf32>
    %cst_37 = arith.constant 1.000000e+00 : f32
    %209 = vector.broadcast %cst_37 : f32 to vector<8x32xf32>
    %210 = arith.addf %209, %208 : vector<8x32xf32>
    %211 = arith.divf %209, %210 : vector<8x32xf32>
    %212 = vector.extract_strided_slice %195 {offsets = [0, 64], sizes = [8, 32], strides = [1, 1]} : vector<8x128xf32> to vector<8x32xf32>
    %213 = vector.extract_strided_slice %193 {offsets = [0, 64], sizes = [8, 32], strides = [1, 1]} : vector<8x128xf32> to vector<8x32xf32>
    %214 = arith.addf %213, %11 : vector<8x32xf32>
    %215 = arith.mulf %203, %214 : vector<8x32xf32>
    %216 = arith.addf %212, %215 : vector<8x32xf32>
    %217 = math.tanh %216 : vector<8x32xf32>
    %cst_38 = arith.constant 1.000000e+00 : f32
    %218 = vector.broadcast %cst_38 : f32 to vector<8x32xf32>
    %219 = arith.subf %218, %211 : vector<8x32xf32>
    %220 = arith.mulf %219, %217 : vector<8x32xf32>
    %221 = arith.mulf %211, %192 : vector<8x32xf32>
    %222 = arith.addf %220, %221 : vector<8x32xf32>
    %cst_39 = arith.constant dense<0.000000e+00> : vector<8x128xf32>
    %223 = tpu.matmul %222, %8, %cst_39 {dimension_numbers = #tpu.dot_dimension_numbers<[1], [0], [0], [1], [0, 0, 1, 1], [], []>} : vector<8x32xf32>, vector<32x128xf32>, vector<8x128xf32> -> vector<8x128xf32>
    %224 = vector.extract_strided_slice %7 {offsets = [7, 0, 0], sizes = [1, 8, 128], strides = [1, 1, 1]} : vector<8x8x128xf32> to vector<1x8x128xf32>
    %225 = vector.shape_cast %224 : vector<1x8x128xf32> to vector<8x128xf32>
    %226 = vector.extract_strided_slice %225 {offsets = [0, 0], sizes = [8, 32], strides = [1, 1]} : vector<8x128xf32> to vector<8x32xf32>
    %227 = vector.extract_strided_slice %223 {offsets = [0, 0], sizes = [8, 32], strides = [1, 1]} : vector<8x128xf32> to vector<8x32xf32>
    %228 = arith.addf %226, %227 : vector<8x32xf32>
    %229 = arith.negf %228 : vector<8x32xf32>
    %230 = math.exp %229 : vector<8x32xf32>
    %cst_40 = arith.constant 1.000000e+00 : f32
    %231 = vector.broadcast %cst_40 : f32 to vector<8x32xf32>
    %232 = arith.addf %231, %230 : vector<8x32xf32>
    %233 = arith.divf %231, %232 : vector<8x32xf32>
    %234 = vector.extract_strided_slice %225 {offsets = [0, 32], sizes = [8, 32], strides = [1, 1]} : vector<8x128xf32> to vector<8x32xf32>
    %235 = vector.extract_strided_slice %223 {offsets = [0, 32], sizes = [8, 32], strides = [1, 1]} : vector<8x128xf32> to vector<8x32xf32>
    %236 = arith.addf %234, %235 : vector<8x32xf32>
    %237 = arith.negf %236 : vector<8x32xf32>
    %238 = math.exp %237 : vector<8x32xf32>
    %cst_41 = arith.constant 1.000000e+00 : f32
    %239 = vector.broadcast %cst_41 : f32 to vector<8x32xf32>
    %240 = arith.addf %239, %238 : vector<8x32xf32>
    %241 = arith.divf %239, %240 : vector<8x32xf32>
    %242 = vector.extract_strided_slice %225 {offsets = [0, 64], sizes = [8, 32], strides = [1, 1]} : vector<8x128xf32> to vector<8x32xf32>
    %243 = vector.extract_strided_slice %223 {offsets = [0, 64], sizes = [8, 32], strides = [1, 1]} : vector<8x128xf32> to vector<8x32xf32>
    %244 = arith.addf %243, %11 : vector<8x32xf32>
    %245 = arith.mulf %233, %244 : vector<8x32xf32>
    %246 = arith.addf %242, %245 : vector<8x32xf32>
    %247 = math.tanh %246 : vector<8x32xf32>
    %cst_42 = arith.constant 1.000000e+00 : f32
    %248 = vector.broadcast %cst_42 : f32 to vector<8x32xf32>
    %249 = arith.subf %248, %241 : vector<8x32xf32>
    %250 = arith.mulf %249, %247 : vector<8x32xf32>
    %251 = arith.mulf %241, %222 : vector<8x32xf32>
    %252 = arith.addf %250, %251 : vector<8x32xf32>
    %253 = vector.shape_cast %42 : vector<8x32xf32> to vector<1x8x32xf32>
    %254 = vector.shape_cast %72 : vector<8x32xf32> to vector<1x8x32xf32>
    %255 = vector.shape_cast %102 : vector<8x32xf32> to vector<1x8x32xf32>
    %256 = vector.shape_cast %132 : vector<8x32xf32> to vector<1x8x32xf32>
    %257 = vector.shape_cast %162 : vector<8x32xf32> to vector<1x8x32xf32>
    %258 = vector.shape_cast %192 : vector<8x32xf32> to vector<1x8x32xf32>
    %259 = vector.shape_cast %222 : vector<8x32xf32> to vector<1x8x32xf32>
    %260 = vector.shape_cast %252 : vector<8x32xf32> to vector<1x8x32xf32>
    %261 = tpu.concatenate %253, %254, %255, %256, %257, %258, %259, %260 in 0 : vector<1x8x32xf32>, vector<1x8x32xf32>, vector<1x8x32xf32>, vector<1x8x32xf32>, vector<1x8x32xf32>, vector<1x8x32xf32>, vector<1x8x32xf32>, vector<1x8x32xf32> -> vector<8x8x32xf32>
    %262 = vector.shape_cast %261 : vector<8x8x32xf32> to vector<64x32xf32>
    %c0_43 = arith.constant 0 : index
    %c0_44 = arith.constant 0 : index
    %263 = vector.load %arg5[%c0_43, %c0_44] : memref<32x32xf32, #tpu.memory_space<vmem>>, vector<32x32xf32>
    %cst_45 = arith.constant dense<0.000000e+00> : vector<64x32xf32>
    %264 = tpu.matmul %262, %263, %cst_45 {dimension_numbers = #tpu.dot_dimension_numbers<[1], [0], [0], [1], [0, 0, 1, 1], [], []>} : vector<64x32xf32>, vector<32x32xf32>, vector<64x32xf32> -> vector<64x32xf32>
    %c0_46 = arith.constant 0 : index
    %c0_47 = arith.constant 0 : index
    %265 = vector.load %arg6[%c0_46, %c0_47] : memref<1x32xf32, #tpu.memory_space<vmem>>, vector<1x32xf32>
    %266 = vector.broadcast %265 : vector<1x32xf32> to vector<64x32xf32>
    %267 = arith.addf %264, %266 : vector<64x32xf32>
    %268 = math.tanh %267 : vector<64x32xf32>
    %269 = vector.shape_cast %268 : vector<64x32xf32> to vector<8x8x32xf32>
    %270 = arith.mulf %269, %0 : vector<8x8x32xf32>
    %cst_48 = arith.constant dense<0.000000e+00> : vector<8x32xf32>
    %271 = vector.multi_reduction <add>, %270, %cst_48 [0] : vector<8x8x32xf32> to vector<8x32xf32>
    %c0_49 = arith.constant 0 : index
    %c0_50 = arith.constant 0 : index
    %272 = vector.load %arg7[%c0_49, %c0_50] : memref<32x16xf32, #tpu.memory_space<vmem>>, vector<32x16xf32>
    %cst_51 = arith.constant dense<0.000000e+00> : vector<8x16xf32>
    %273 = tpu.matmul %271, %272, %cst_51 {dimension_numbers = #tpu.dot_dimension_numbers<[1], [0], [0], [1], [0, 0, 1, 1], [], []>} : vector<8x32xf32>, vector<32x16xf32>, vector<8x16xf32> -> vector<8x16xf32>
    %c0_52 = arith.constant 0 : index
    %c0_53 = arith.constant 0 : index
    %274 = vector.load %arg8[%c0_52, %c0_53] : memref<1x16xf32, #tpu.memory_space<vmem>>, vector<1x16xf32>
    %275 = vector.broadcast %274 : vector<1x16xf32> to vector<8x16xf32>
    %276 = arith.addf %273, %275 : vector<8x16xf32>
    %c0_54 = arith.constant 0 : index
    %c0_55 = arith.constant 0 : index
    %277 = vector.load %arg9[%c0_54, %c0_55] : memref<8x16xf32, #tpu.memory_space<vmem>>, vector<8x16xf32>
    tpu.vector_store %arg9[%c0_54, %c0_55], %276 {strides = array<i32>} : memref<8x16xf32, #tpu.memory_space<vmem>>, vector<8x16xf32>,
    return
  }
}

</mosaic_0001>

<llo_original>
// kernel: tpu_custom_call.1
$region0: #{tpu_custom_call.1}
  #allocation0 [shape = 'u32[]', space=smem, size = 0x4, offset = 0x4, fixed_abs, tag = 'smem constant byte address 0x4 - core index']
  #allocation1 [shape = 'u32[144,128]{1,0:T(1,128)}', space=vmem, size = 0x12000, scoped, tag = 'internal scratch']
  %s0 = inlined_call_operand.hbm [shape: f32[8,8,32], index: 0, kind: input, shape index: {}]
  %s1 = inlined_call_operand.vmem [shape: f32[32,128], index: 1, kind: input, shape index: {}]
  %s2 = inlined_call_operand.hbm [shape: f32[32,128], index: 2, kind: input, shape index: {}]
  %s3 = inlined_call_operand.vmem [shape: f32[1,128], index: 3, kind: input, shape index: {}]
  %s4 = inlined_call_operand.vmem [shape: f32[1,32], index: 4, kind: input, shape index: {}]
  %s5 = inlined_call_operand.vmem [shape: f32[32,32], index: 5, kind: input, shape index: {}]
  %s6 = inlined_call_operand.vmem [shape: f32[1,32], index: 6, kind: input, shape index: {}]
  %s7 = inlined_call_operand.vmem [shape: f32[32,16], index: 7, kind: input, shape index: {}]
  %s8 = inlined_call_operand.vmem [shape: f32[1,16], index: 8, kind: input, shape index: {}]
  %s9 = inlined_call_operand.hbm [shape: f32[8,16], index: 9, kind: output, shape index: {}]
  %s10 = sld [smem:[#allocation0]]
  $region54: #{tpu_custom_call.1} parent=0
    _
  %s12 = ssub.s32 1, %s10
  %s13 = scalar_select 0, %s12, %s10
  $region1: #{tpu_custom_call.1} parent=0
    #allocation2 [shape = 'u8[32768]{0}', space=vmem, size = 0x8000, scoped, tag = 'input window, operand 0, single buffered']
    #allocation3 [shape = 's32[1]{0}', space=sflag, size = 0x4, scoped, tag = 'scoped memory for tpu_custom_call.1']
    #allocation4 [shape = 's32[1]{0}', space=sflag, size = 0x4, scoped, tag = 'scoped memory for tpu_custom_call.1']
    #allocation5 [shape = 'u8[16384]{0}', space=vmem, size = 0x4000, scoped, tag = 'input window, operand 2, single buffered']
    #allocation6 [shape = 's32[1]{0}', space=sflag, size = 0x4, scoped, tag = 'scoped memory for tpu_custom_call.1']
    #allocation7 [shape = 'u8[4096]{0}', space=vmem, size = 0x1000, scoped, tag = 'output window, operand 0, single buffered']
    %14 = vsyncpa [#allocation3], 0
    %15 = vsyncpa [#allocation6], 0
    %16 = vsyncpa [#allocation4], 0
    // Predicated region
    $region2: #{tpu_custom_call.1} parent=1 // pred_check
      _
    $region3: #{tpu_custom_call.1} parent=1 // pred_check_branch
      %18 = sbr.rel (0) target = $region5
    $region4: #{tpu_custom_call.1} parent=1 // pred_region
      %s20 = ssub.s32 1024, 1024
      %21 = vsyncadd [#allocation3], %s20
      %s22 = sshll.u32 [#allocation2], 4
      %s23 = int_to_ptr.vmem [resolvable:$true] %s22
      %28 = dma.hbm_to_vmem [thread:$0]  %s0, 1024, %s23, [#allocation3], 128, 128, 8
    $region5: #{tpu_custom_call.1} parent=1 // pred_fallthru
      _
    // Predicated region
    $region6: #{tpu_custom_call.1} parent=1 // pred_check
      _
    $region7: #{tpu_custom_call.1} parent=1 // pred_check_branch
      %30 = sbr.rel (0) target = $region9
    $region8: #{tpu_custom_call.1} parent=1 // pred_region
      _
    $region9: #{tpu_custom_call.1} parent=1 // pred_fallthru
      _
    // Predicated region
    $region10: #{tpu_custom_call.1} parent=1 // pred_check
      _
    $region11: #{tpu_custom_call.1} parent=1 // pred_check_branch
      %32 = sbr.rel (0) target = $region13
    $region12: #{tpu_custom_call.1} parent=1 // pred_region
      %s34 = ssub.s32 512, 512
      %35 = vsyncadd [#allocation6], %s34
      %s36 = sshll.u32 [#allocation5], 4
      %s37 = int_to_ptr.vmem [resolvable:$true] %s36
      %42 = dma.hbm_to_vmem [thread:$0]  %s2, 512, %s37, [#allocation6], 128, 128, 8
    $region13: #{tpu_custom_call.1} parent=1 // pred_fallthru
      _
    // Predicated region
    $region14: #{tpu_custom_call.1} parent=1 // pred_check
      _
    $region15: #{tpu_custom_call.1} parent=1 // pred_check_branch
      %44 = sbr.rel (0) target = $region17
    $region16: #{tpu_custom_call.1} parent=1 // pred_region
      _
    $region17: #{tpu_custom_call.1} parent=1 // pred_fallthru
      _
    // Predicated region
    $region18: #{tpu_custom_call.1} parent=1 // pred_check
      _
    $region19: #{tpu_custom_call.1} parent=1 // pred_check_branch
      %46 = sbr.rel (0) target = $region21
    $region20: #{tpu_custom_call.1} parent=1 // pred_region
      _
    $region21: #{tpu_custom_call.1} parent=1 // pred_fallthru
      _
    // Predicated region
    $region22: #{tpu_custom_call.1} parent=1 // pred_check
      _
    $region23: #{tpu_custom_call.1} parent=1 // pred_check_branch
      %48 = sbr.rel (0) target = $region25
    $region24: #{tpu_custom_call.1} parent=1 // pred_region
      _
    $region25: #{tpu_custom_call.1} parent=1 // pred_fallthru
      _
    // Predicated region
    $region26: #{tpu_custom_call.1} parent=1 // pred_check
      _
    $region27: #{tpu_custom_call.1} parent=1 // pred_check_branch
      %50 = sbr.rel (0) target = $region29
    $region28: #{tpu_custom_call.1} parent=1 // pred_region
      _
    $region29: #{tpu_custom_call.1} parent=1 // pred_fallthru
      _
    // Predicated region
    $region30: #{tpu_custom_call.1} parent=1 // pred_check
      _
    $region31: #{tpu_custom_call.1} parent=1 // pred_check_branch
      %52 = sbr.rel (0) target = $region33
    $region32: #{tpu_custom_call.1} parent=1 // pred_region
      _
    $region33: #{tpu_custom_call.1} parent=1 // pred_fallthru
      _
    // Predicated region
    $region34: #{tpu_custom_call.1} parent=1 // pred_check
      _
    $region35: #{tpu_custom_call.1} parent=1 // pred_check_branch
      %54 = sbr.rel (0) target = $region37
    $region36: #{tpu_custom_call.1} parent=1 // pred_region
      _
    $region37: #{tpu_custom_call.1} parent=1 // pred_fallthru
      _
    // Predicated region
    $region38: #{tpu_custom_call.1} parent=1 // pred_check
      _
    $region39: #{tpu_custom_call.1} parent=1 // pred_check_branch
      %56 = sbr.rel (0) target = $region41
    $region40: #{tpu_custom_call.1} parent=1 // pred_region
      %57 = dma.done [#allocation3], 1024
    $region41: #{tpu_custom_call.1} parent=1 // pred_fallthru
      _
    // Predicated region
    $region42: #{tpu_custom_call.1} parent=1 // pred_check
      _
    $region43: #{tpu_custom_call.1} parent=1 // pred_check_branch
      %59 = sbr.rel (0) target = $region45
    $region44: #{tpu_custom_call.1} parent=1 // pred_region
      %60 = dma.done [#allocation6], 512
    $region45: #{tpu_custom_call.1} parent=1 // pred_fallthru
      _
    %v61 = vld [vmem:[#allocation2] sm:$0xff]
    %v62 = vld [vmem:[#allocation2 + $0x8] sm:$0xff]
    %v63 = vld [vmem:[#allocation2 + $0x10] sm:$0xff]
    %v64 = vld [vmem:[#allocation2 + $0x18] sm:$0xff]
    %v65 = vld [vmem:[#allocation2 + $0x20] sm:$0xff]
    %v66 = vld [vmem:[#allocation2 + $0x28] sm:$0xff]
    %v67 = vld [vmem:[#allocation2 + $0x30] sm:$0xff]
    %v68 = vld [vmem:[#allocation2 + $0x38] sm:$0xff]
    %v69 = vld [vmem:[%s1] sm:$0xff]
    %v70 = vld [vmem:[%s1 + $0x8] sm:$0xff]
    %v71 = vld [vmem:[%s1 + $0x10] sm:$0xff]
    %v72 = vld [vmem:[%s1 + $0x18] sm:$0xff]
    %v73 = vld [vmem:[%s3] sm:$0x1]
    %v75 = vlaneseq
    %v76 = vshrl.u32 %v75, 7
    %v77 = vsub.s32 0, %v76
    %v78 = vrot.slane %v73, %v77
    %vm80 = vcmask 261120
    %v82 = vsel %vm80, %v61, 0
    %v85 = vsel %vm80, %v62, 0
    %v88 = vsel %vm80, %v63, 0
    %v91 = vsel %vm80, %v64, 0
    %v94 = vsel %vm80, %v65, 0
    %v97 = vsel %vm80, %v66, 0
    %v100 = vsel %vm80, %v67, 0
    %v103 = vsel %vm80, %v68, 0
    %105 = vmatprep.subr.mxu0 0.0
    %106 = vmatpush1.msra.mxu0 %v69
    %107 = vmatprep.subr.mxu0 0.0
    %108 = vmatpush1.msra.mxu0 %v70
    %109 = vmatprep.subr.mxu0 0.0
    %110 = vmatpush1.msra.mxu0 %v71
    %111 = vmatprep.subr.mxu0 0.0
    %112 = vmatpush1.msra.mxu0 %v72
    %113 = vmatprep.subr.mxu0 0.0
    %114 = vmatpush1.msra.mxu0 0.0
    %115 = vmatprep.subr.mxu0 0.0
    %116 = vmatpush1.msra.mxu0 0.0
    %117 = vmatprep.subr.mxu0 0.0
    %118 = vmatpush1.msra.mxu0 0.0
    %119 = vmatprep.subr.mxu0 0.0
    %120 = vmatpush1.msra.mxu0 0.0
    %121 = vmatprep.subr.mxu0 0.0
    %122 = vmatpush1.msra.mxu0 0.0
    %123 = vmatprep.subr.mxu0 0.0
    %124 = vmatpush1.msra.mxu0 0.0
    %125 = vmatprep.subr.mxu0 0.0
    %126 = vmatpush1.msra.mxu0 0.0
    %127 = vmatprep.subr.mxu0 0.0
    %128 = vmatpush1.msra.mxu0 0.0
    %129 = vmatprep.subr.mxu0 0.0
    %130 = vmatpush1.msra.mxu0 0.0
    %131 = vmatprep.subr.mxu0 0.0
    %132 = vmatpush1.msra.mxu0 0.0
    %133 = vmatprep.subr.mxu0 0.0
    %134 = vmatpush1.msra.mxu0 0.0
    %135 = vmatprep.subr.mxu0 0.0
    %136 = vmatpush1.msra.mxu0 0.0
    %137 = vmatprep.subr.mxu0 0.0
    %138 = vmatpush1.msra.mxu0 0.0
    %139 = vmatprep.subr.mxu0 0.0
    %140 = vmatpush1.msra.mxu0 0.0
    %141 = vmatprep.subr.mxu0 0.0
    %142 = vmatpush1.msra.mxu0 0.0
    %143 = vmatprep.subr.mxu0 0.0
    %144 = vmatpush1.msra.mxu0 0.0
    %145 = vmatprep.subr.mxu0 0.0
    %146 = vmatpush1.msra.mxu0 0.0
    %147 = vmatprep.subr.mxu0 0.0
    %148 = vmatpush1.msra.mxu0 0.0
    %149 = vmatprep.subr.mxu0 0.0
    %150 = vmatpush1.msra.mxu0 0.0
    %151 = vmatprep.subr.mxu0 0.0
    %152 = vmatpush1.msra.mxu0 0.0
    %153 = vmatprep.subr.mxu0 0.0
    %154 = vmatpush1.msra.mxu0 0.0
    %155 = vmatprep.subr.mxu0 0.0
    %156 = vmatpush1.msra.mxu0 0.0
    %157 = vmatprep.subr.mxu0 0.0
    %158 = vmatpush1.msra.mxu0 0.0
    %159 = vmatprep.subr.mxu0 0.0
    %160 = vmatpush1.msra.mxu0 0.0
    %161 = vmatprep.subr.mxu0 0.0
    %162 = vmatpush1.msra.mxu0 0.0
    %163 = vmatprep.subr.mxu0 0.0
    %164 = vmatpush1.msra.mxu0 0.0
    %165 = vmatprep.subr.mxu0 0.0
    %166 = vmatpush1.msra.mxu0 0.0
    %167 = vmatprep.subr.mxu0 0.0
    %168 = vmatpush1.msra.mxu0 0.0
    %169 = vmatprep.mubr.f32.mxu0 0.0
    %170 = vmatmul.mubr.f32.gmra.mrb[0].mxu0 %v82
    %v171 = vpop.f32.mrb[0].mxu0
    %v172 = vadd.f32 %v78, %v171
    %v173 = vpop.f32.mrb[0].mxu0
    %174 = vmatprep.mubr.f32.mxu0 0.0
    %175 = vmatmul.mubr.f32.gmra.mrb[0].mxu0 %v85
    %v176 = vpop.f32.mrb[0].mxu0
    %v177 = vadd.f32 %v78, %v176
    %v178 = vpop.f32.mrb[0].mxu0
    %179 = vmatprep.mubr.f32.mxu0 0.0
    %180 = vmatmul.mubr.f32.gmra.mrb[0].mxu0 %v88
    %v181 = vpop.f32.mrb[0].mxu0
    %v182 = vadd.f32 %v78, %v181
    %v183 = vpop.f32.mrb[0].mxu0
    %184 = vmatprep.mubr.f32.mxu0 0.0
    %185 = vmatmul.mubr.f32.gmra.mrb[0].mxu0 %v91
    %v186 = vpop.f32.mrb[0].mxu0
    %v187 = vadd.f32 %v78, %v186
    %v188 = vpop.f32.mrb[0].mxu0
    %189 = vmatprep.mubr.f32.mxu0 0.0
    %190 = vmatmul.mubr.f32.gmra.mrb[0].mxu0 %v94
    %v191 = vpop.f32.mrb[0].mxu0
    %v192 = vadd.f32 %v78, %v191
    %v193 = vpop.f32.mrb[0].mxu0
    %194 = vmatprep.mubr.f32.mxu0 0.0
    %195 = vmatmul.mubr.f32.gmra.mrb[0].mxu0 %v97
    %v196 = vpop.f32.mrb[0].mxu0
    %v197 = vadd.f32 %v78, %v196
    %v198 = vpop.f32.mrb[0].mxu0
    %199 = vmatprep.mubr.f32.mxu0 0.0
    %200 = vmatmul.mubr.f32.gmra.mrb[0].mxu0 %v100
    %v201 = vpop.f32.mrb[0].mxu0
    %v202 = vadd.f32 %v78, %v201
    %v203 = vpop.f32.mrb[0].mxu0
    %204 = vmatprep.mubr.f32.mxu0 0.0
    %205 = vmatmul.mubr.f32.gmra.mrb[0].mxu0 %v103
    %v206 = vpop.f32.mrb[0].mxu0
    %v207 = vadd.f32 %v78, %v206
    %v208 = vpop.f32.mrb[0].mxu0
    %209 = vdwg.mxu0
    %v210 = vld [vmem:[#allocation5] sm:$0xff]
    %v211 = vld [vmem:[#allocation5 + $0x8] sm:$0xff]
    %v212 = vld [vmem:[#allocation5 + $0x10] sm:$0xff]
    %v213 = vld [vmem:[#allocation5 + $0x18] sm:$0xff]
    %v214 = vld [vmem:[%s4] sm:$0x1]
    %v216 = vlaneseq
    %v217 = vshrl.u32 %v216, 7
    %v218 = vsub.s32 0, %v217
    %v219 = vrot.slane %v214, %v218
    %v221 = vsel %vm80, 0.0, 0
    %223 = vmatprep.subr.mxu0 0.0
    %224 = vmatpush1.msra.mxu0 %v210
    %225 = vmatprep.subr.mxu0 0.0
    %226 = vmatpush1.msra.mxu0 %v211
    %227 = vmatprep.subr.mxu0 0.0
    %228 = vmatpush1.msra.mxu0 %v212
    %229 = vmatprep.subr.mxu0 0.0
    %230 = vmatpush1.msra.mxu0 %v213
    %231 = vmatprep.subr.mxu0 0.0
    %232 = vmatpush1.msra.mxu0 0.0
    %233 = vmatprep.subr.mxu0 0.0
    %234 = vmatpush1.msra.mxu0 0.0
    %235 = vmatprep.subr.mxu0 0.0
    %236 = vmatpush1.msra.mxu0 0.0
    %237 = vmatprep.subr.mxu0 0.0
    %238 = vmatpush1.msra.mxu0 0.0
    %239 = vmatprep.subr.mxu0 0.0
    %240 = vmatpush1.msra.mxu0 0.0
    %241 = vmatprep.subr.mxu0 0.0
    %242 = vmatpush1.msra.mxu0 0.0
    %243 = vmatprep.subr.mxu0 0.0
    %244 = vmatpush1.msra.mxu0 0.0
    %245 = vmatprep.subr.mxu0 0.0
    %246 = vmatpush1.msra.mxu0 0.0
    %247 = vmatprep.subr.mxu0 0.0
    %248 = vmatpush1.msra.mxu0 0.0
    %249 = vmatprep.subr.mxu0 0.0
    %250 = vmatpush1.msra.mxu0 0.0
    %251 = vmatprep.subr.mxu0 0.0
    %252 = vmatpush1.msra.mxu0 0.0
    %253 = vmatprep.subr.mxu0 0.0
    %254 = vmatpush1.msra.mxu0 0.0
    %255 = vmatprep.subr.mxu0 0.0
    %256 = vmatpush1.msra.mxu0 0.0
    %257 = vmatprep.subr.mxu0 0.0
    %258 = vmatpush1.msra.mxu0 0.0
    %259 = vmatprep.subr.mxu0 0.0
    %260 = vmatpush1.msra.mxu0 0.0
    %261 = vmatprep.subr.mxu0 0.0
    %262 = vmatpush1.msra.mxu0 0.0
    %263 = vmatprep.subr.mxu0 0.0
    %264 = vmatpush1.msra.mxu0 0.0
    %265 = vmatprep.subr.mxu0 0.0
    %266 = vmatpush1.msra.mxu0 0.0
    %267 = vmatprep.subr.mxu0 0.0
    %268 = vmatpush1.msra.mxu0 0.0
    %269 = vmatprep.subr.mxu0 0.0
    %270 = vmatpush1.msra.mxu0 0.0
    %271 = vmatprep.subr.mxu0 0.0
    %272 = vmatpush1.msra.mxu0 0.0
    %273 = vmatprep.subr.mxu0 0.0
    %274 = vmatpush1.msra.mxu0 0.0
    %275 = vmatprep.subr.mxu0 0.0
    %276 = vmatpush1.msra.mxu0 0.0
    %277 = vmatprep.subr.mxu0 0.0
    %278 = vmatpush1.msra.mxu0 0.0
    %279 = vmatprep.subr.mxu0 0.0
    %280 = vmatpush1.msra.mxu0 0.0
    %281 = vmatprep.subr.mxu0 0.0
    %282 = vmatpush1.msra.mxu0 0.0
    %283 = vmatprep.subr.mxu0 0.0
    %284 = vmatpush1.msra.mxu0 0.0
    %285 = vmatprep.subr.mxu0 0.0
    %286 = vmatpush1.msra.mxu0 0.0
    %287 = vmatprep.mubr.f32.mxu0 0.0
    %288 = vmatmul.mubr.f32.gmra.mrb[0].mxu0 %v221
    %v289 = vpop.f32.mrb[0].mxu0
    %v290 = vadd.f32 0.0, %v289
    %v291 = vpop.f32.mrb[0].mxu0
    %292 = vdwg.mxu0
    %v293 = vadd.f32 %v172, %v290
    %v294 = vxor.u32 %v293, 2147483648
    %v295 = vmul.f32 %v294, 1.442695
    %v296 = vpow.pop %v295
    %v297 = vadd.f32 %v296, 1.0
    %v298 = vrcp.pop %v297
    %v299 = vmul.f32 1.0, %v298
    %300 = vrot.lane.b32.xlu0 %v219, 64
    %v301 = vpop.permute.xlu0 %300
    %v303 = vadd.f32 %v290, %v301
    %305 = vrot.lane.b32.xlu0 %v303, 64
    %v306 = vpop.permute.xlu0 %305
    %v308 = vmul.f32 %v299, %v306
    %310 = vrot.lane.b32.xlu0 %v308, 64
    %v311 = vpop.permute.xlu0 %310
    %v313 = vadd.f32 %v172, %v311
    %v314 = vtanh.pop %v313
    %v315 = vsub.f32 1.0, %v299
    %317 = vrot.lane.b32.xlu0 %v314, 96
    %v318 = vpop.permute.xlu0 %317
    %v320 = vmul.f32 %v315, %v318
    %v321 = vmul.f32 %v299, 0.0
    %v322 = vadd.f32 %v320, %v321
    %324 = vrot.lane.b32.xlu0 %v322, 96
    %v325 = vpop.permute.xlu0 %324
    %v326 = vsel %vm80, %v325, 0
    %328 = vmatprep.subr.mxu0 0.0
    %329 = vmatpush1.msra.mxu0 %v210
    %330 = vmatprep.subr.mxu0 0.0
    %331 = vmatpush1.msra.mxu0 %v211
    %332 = vmatprep.subr.mxu0 0.0
    %333 = vmatpush1.msra.mxu0 %v212
    %334 = vmatprep.subr.mxu0 0.0
    %335 = vmatpush1.msra.mxu0 %v213
    %336 = vmatprep.subr.mxu0 0.0
    %337 = vmatpush1.msra.mxu0 0.0
    %338 = vmatprep.subr.mxu0 0.0
    %339 = vmatpush1.msra.mxu0 0.0
    %340 = vmatprep.subr.mxu0 0.0
    %341 = vmatpush1.msra.mxu0 0.0
    %342 = vmatprep.subr.mxu0 0.0
    %343 = vmatpush1.msra.mxu0 0.0
    %344 = vmatprep.subr.mxu0 0.0
    %345 = vmatpush1.msra.mxu0 0.0
    %346 = vmatprep.subr.mxu0 0.0
    %347 = vmatpush1.msra.mxu0 0.0
    %348 = vmatprep.subr.mxu0 0.0
    %349 = vmatpush1.msra.mxu0 0.0
    %350 = vmatprep.subr.mxu0 0.0
    %351 = vmatpush1.msra.mxu0 0.0
    %352 = vmatprep.subr.mxu0 0.0
    %353 = vmatpush1.msra.mxu0 0.0
    %354 = vmatprep.subr.mxu0 0.0
    %355 = vmatpush1.msra.mxu0 0.0
    %356 = vmatprep.subr.mxu0 0.0
    %357 = vmatpush1.msra.mxu0 0.0
    %358 = vmatprep.subr.mxu0 0.0
    %359 = vmatpush1.msra.mxu0 0.0
    %360 = vmatprep.subr.mxu0 0.0
    %361 = vmatpush1.msra.mxu0 0.0
    %362 = vmatprep.subr.mxu0 0.0
    %363 = vmatpush1.msra.mxu0 0.0
    %364 = vmatprep.subr.mxu0 0.0
    %365 = vmatpush1.msra.mxu0 0.0
    %366 = vmatprep.subr.mxu0 0.0
    %367 = vmatpush1.msra.mxu0 0.0
    %368 = vmatprep.subr.mxu0 0.0
    %369 = vmatpush1.msra.mxu0 0.0
    %370 = vmatprep.subr.mxu0 0.0
    %371 = vmatpush1.msra.mxu0 0.0
    %372 = vmatprep.subr.mxu0 0.0
    %373 = vmatpush1.msra.mxu0 0.0
    %374 = vmatprep.subr.mxu0 0.0
    %375 = vmatpush1.msra.mxu0 0.0
    %376 = vmatprep.subr.mxu0 0.0
    %377 = vmatpush1.msra.mxu0 0.0
    %378 = vmatprep.subr.mxu0 0.0
    %379 = vmatpush1.msra.mxu0 0.0
    %380 = vmatprep.subr.mxu0 0.0
    %381 = vmatpush1.msra.mxu0 0.0
    %382 = vmatprep.subr.mxu0 0.0
    %383 = vmatpush1.msra.mxu0 0.0
    %384 = vmatprep.subr.mxu0 0.0
    %385 = vmatpush1.msra.mxu0 0.0
    %386 = vmatprep.subr.mxu0 0.0
    %387 = vmatpush1.msra.mxu0 0.0
    %388 = vmatprep.subr.mxu0 0.0
    %389 = vmatpush1.msra.mxu0 0.0
    %390 = vmatprep.subr.mxu0 0.0
    %391 = vmatpush1.msra.mxu0 0.0
    %392 = vmatprep.mubr.f32.mxu0 0.0
    %393 = vmatmul.mubr.f32.gmra.mrb[0].mxu0 %v326
    %v394 = vpop.f32.mrb[0].mxu0
    %v395 = vadd.f32 0.0, %v394
    %v396 = vpop.f32.mrb[0].mxu0
    %397 = vdwg.mxu0
    %v398 = vadd.f32 %v177, %v395
    %v399 = vxor.u32 %v398, 2147483648
    %v400 = vmul.f32 %v399, 1.442695
    %v401 = vpow.pop %v400
    %v402 = vadd.f32 %v401, 1.0
    %v403 = vrcp.pop %v402
    %v404 = vmul.f32 1.0, %v403
    %v405 = vadd.f32 %v395, %v301
    %407 = vrot.lane.b32.xlu0 %v405, 64
    %v408 = vpop.permute.xlu0 %407
    %v410 = vmul.f32 %v404, %v408
    %412 = vrot.lane.b32.xlu0 %v410, 64
    %v413 = vpop.permute.xlu0 %412
    %v415 = vadd.f32 %v177, %v413
    %v416 = vtanh.pop %v415
    %v417 = vsub.f32 1.0, %v404
    %419 = vrot.lane.b32.xlu0 %v416, 96
    %v420 = vpop.permute.xlu0 %419
    %v422 = vmul.f32 %v417, %v420
    %v423 = vmul.f32 %v404, %v322
    %v424 = vadd.f32 %v422, %v423
    %426 = vrot.lane.b32.xlu0 %v424, 96
    %v427 = vpop.permute.xlu0 %426
    %v428 = vsel %vm80, %v427, 0
    %430 = vmatprep.subr.mxu0 0.0
    %431 = vmatpush1.msra.mxu0 %v210
    %432 = vmatprep.subr.mxu0 0.0
    %433 = vmatpush1.msra.mxu0 %v211
    %434 = vmatprep.subr.mxu0 0.0
    %435 = vmatpush1.msra.mxu0 %v212
    %436 = vmatprep.subr.mxu0 0.0
    %437 = vmatpush1.msra.mxu0 %v213
    %438 = vmatprep.subr.mxu0 0.0
    %439 = vmatpush1.msra.mxu0 0.0
    %440 = vmatprep.subr.mxu0 0.0
    %441 = vmatpush1.msra.mxu0 0.0
    %442 = vmatprep.subr.mxu0 0.0
    %443 = vmatpush1.msra.mxu0 0.0
    %444 = vmatprep.subr.mxu0 0.0
    %445 = vmatpush1.msra.mxu0 0.0
    %446 = vmatprep.subr.mxu0 0.0
    %447 = vmatpush1.msra.mxu0 0.0
    %448 = vmatprep.subr.mxu0 0.0
    %449 = vmatpush1.msra.mxu0 0.0
    %450 = vmatprep.subr.mxu0 0.0
    %451 = vmatpush1.msra.mxu0 0.0
    %452 = vmatprep.subr.mxu0 0.0
    %453 = vmatpush1.msra.mxu0 0.0
    %454 = vmatprep.subr.mxu0 0.0
    %455 = vmatpush1.msra.mxu0 0.0
    %456 = vmatprep.subr.mxu0 0.0
    %457 = vmatpush1.msra.mxu0 0.0
    %458 = vmatprep.subr.mxu0 0.0
    %459 = vmatpush1.msra.mxu0 0.0
    %460 = vmatprep.subr.mxu0 0.0
    %461 = vmatpush1.msra.mxu0 0.0
    %462 = vmatprep.subr.mxu0 0.0
    %463 = vmatpush1.msra.mxu0 0.0
    %464 = vmatprep.subr.mxu0 0.0
    %465 = vmatpush1.msra.mxu0 0.0
    %466 = vmatprep.subr.mxu0 0.0
    %467 = vmatpush1.msra.mxu0 0.0
    %468 = vmatprep.subr.mxu0 0.0
    %469 = vmatpush1.msra.mxu0 0.0
    %470 = vmatprep.subr.mxu0 0.0
    %471 = vmatpush1.msra.mxu0 0.0
    %472 = vmatprep.subr.mxu0 0.0
    %473 = vmatpush1.msra.mxu0 0.0
    %474 = vmatprep.subr.mxu0 0.0
    %475 = vmatpush1.msra.mxu0 0.0
    %476 = vmatprep.subr.mxu0 0.0
    %477 = vmatpush1.msra.mxu0 0.0
    %478 = vmatprep.subr.mxu0 0.0
    %479 = vmatpush1.msra.mxu0 0.0
    %480 = vmatprep.subr.mxu0 0.0
    %481 = vmatpush1.msra.mxu0 0.0
    %482 = vmatprep.subr.mxu0 0.0
    %483 = vmatpush1.msra.mxu0 0.0
    %484 = vmatprep.subr.mxu0 0.0
    %485 = vmatpush1.msra.mxu0 0.0
    %486 = vmatprep.subr.mxu0 0.0
    %487 = vmatpush1.msra.mxu0 0.0
    %488 = vmatprep.subr.mxu0 0.0
    %489 = vmatpush1.msra.mxu0 0.0
    %490 = vmatprep.subr.mxu0 0.0
    %491 = vmatpush1.msra.mxu0 0.0
    %492 = vmatprep.subr.mxu0 0.0
    %493 = vmatpush1.msra.mxu0 0.0
    %494 = vmatprep.mubr.f32.mxu0 0.0
    %495 = vmatmul.mubr.f32.gmra.mrb[0].mxu0 %v428
    %v496 = vpop.f32.mrb[0].mxu0
    %v497 = vadd.f32 0.0, %v496
    %v498 = vpop.f32.mrb[0].mxu0
    %499 = vdwg.mxu0
    %v500 = vadd.f32 %v182, %v497
    %v501 = vxor.u32 %v500, 2147483648
    %v502 = vmul.f32 %v501, 1.442695
    %v503 = vpow.pop %v502
    %v504 = vadd.f32 %v503, 1.0
    %v505 = vrcp.pop %v504
    %v506 = vmul.f32 1.0, %v505
    %v507 = vadd.f32 %v497, %v301
    %509 = vrot.lane.b32.xlu0 %v507, 64
    %v510 = vpop.permute.xlu0 %509
    %v512 = vmul.f32 %v506, %v510
    %514 = vrot.lane.b32.xlu0 %v512, 64
    %v515 = vpop.permute.xlu0 %514
    %v517 = vadd.f32 %v182, %v515
    %v518 = vtanh.pop %v517
    %v519 = vsub.f32 1.0, %v506
    %521 = vrot.lane.b32.xlu0 %v518, 96
    %v522 = vpop.permute.xlu0 %521
    %v524 = vmul.f32 %v519, %v522
    %v525 = vmul.f32 %v506, %v424
    %v526 = vadd.f32 %v524, %v525
    %528 = vrot.lane.b32.xlu0 %v526, 96
    %v529 = vpop.permute.xlu0 %528
    %v530 = vsel %vm80, %v529, 0
    %532 = vmatprep.subr.mxu0 0.0
    %533 = vmatpush1.msra.mxu0 %v210
    %534 = vmatprep.subr.mxu0 0.0
    %535 = vmatpush1.msra.mxu0 %v211
    %536 = vmatprep.subr.mxu0 0.0
    %537 = vmatpush1.msra.mxu0 %v212
    %538 = vmatprep.subr.mxu0 0.0
    %539 = vmatpush1.msra.mxu0 %v213
    %540 = vmatprep.subr.mxu0 0.0
    %541 = vmatpush1.msra.mxu0 0.0
    %542 = vmatprep.subr.mxu0 0.0
    %543 = vmatpush1.msra.mxu0 0.0
    %544 = vmatprep.subr.mxu0 0.0
    %545 = vmatpush1.msra.mxu0 0.0
    %546 = vmatprep.subr.mxu0 0.0
    %547 = vmatpush1.msra.mxu0 0.0
    %548 = vmatprep.subr.mxu0 0.0
    %549 = vmatpush1.msra.mxu0 0.0
    %550 = vmatprep.subr.mxu0 0.0
    %551 = vmatpush1.msra.mxu0 0.0
    %552 = vmatprep.subr.mxu0 0.0
    %553 = vmatpush1.msra.mxu0 0.0
    %554 = vmatprep.subr.mxu0 0.0
    %555 = vmatpush1.msra.mxu0 0.0
    %556 = vmatprep.subr.mxu0 0.0
    %557 = vmatpush1.msra.mxu0 0.0
    %558 = vmatprep.subr.mxu0 0.0
    %559 = vmatpush1.msra.mxu0 0.0
    %560 = vmatprep.subr.mxu0 0.0
    %561 = vmatpush1.msra.mxu0 0.0
    %562 = vmatprep.subr.mxu0 0.0
    %563 = vmatpush1.msra.mxu0 0.0
    %564 = vmatprep.subr.mxu0 0.0
    %565 = vmatpush1.msra.mxu0 0.0
    %566 = vmatprep.subr.mxu0 0.0
    %567 = vmatpush1.msra.mxu0 0.0
    %568 = vmatprep.subr.mxu0 0.0
    %569 = vmatpush1.msra.mxu0 0.0
    %570 = vmatprep.subr.mxu0 0.0
    %571 = vmatpush1.msra.mxu0 0.0
    %572 = vmatprep.subr.mxu0 0.0
    %573 = vmatpush1.msra.mxu0 0.0
    %574 = vmatprep.subr.mxu0 0.0
    %575 = vmatpush1.msra.mxu0 0.0
    %576 = vmatprep.subr.mxu0 0.0
    %577 = vmatpush1.msra.mxu0 0.0
    %578 = vmatprep.subr.mxu0 0.0
    %579 = vmatpush1.msra.mxu0 0.0
    %580 = vmatprep.subr.mxu0 0.0
    %581 = vmatpush1.msra.mxu0 0.0
    %582 = vmatprep.subr.mxu0 0.0
    %583 = vmatpush1.msra.mxu0 0.0
    %584 = vmatprep.subr.mxu0 0.0
    %585 = vmatpush1.msra.mxu0 0.0
    %586 = vmatprep.subr.mxu0 0.0
    %587 = vmatpush1.msra.mxu0 0.0
    %588 = vmatprep.subr.mxu0 0.0
    %589 = vmatpush1.msra.mxu0 0.0
    %590 = vmatprep.subr.mxu0 0.0
    %591 = vmatpush1.msra.mxu0 0.0
    %592 = vmatprep.subr.mxu0 0.0
    %593 = vmatpush1.msra.mxu0 0.0
    %594 = vmatprep.subr.mxu0 0.0
    %595 = vmatpush1.msra.mxu0 0.0
    %596 = vmatprep.mubr.f32.mxu0 0.0
    %597 = vmatmul.mubr.f32.gmra.mrb[0].mxu0 %v530
    %v598 = vpop.f32.mrb[0].mxu0
    %v599 = vadd.f32 0.0, %v598
    %v600 = vpop.f32.mrb[0].mxu0
    %601 = vdwg.mxu0
    %v602 = vadd.f32 %v187, %v599
    %v603 = vxor.u32 %v602, 2147483648
    %v604 = vmul.f32 %v603, 1.442695
    %v605 = vpow.pop %v604
    %v606 = vadd.f32 %v605, 1.0
    %v607 = vrcp.pop %v606
    %v608 = vmul.f32 1.0, %v607
    %v609 = vadd.f32 %v599, %v301
    %611 = vrot.lane.b32.xlu0 %v609, 64
    %v612 = vpop.permute.xlu0 %611
    %v614 = vmul.f32 %v608, %v612
    %616 = vrot.lane.b32.xlu0 %v614, 64
    %v617 = vpop.permute.xlu0 %616
    %v619 = vadd.f32 %v187, %v617
    %v620 = vtanh.pop %v619
    %v621 = vsub.f32 1.0, %v608
    %623 = vrot.lane.b32.xlu0 %v620, 96
    %v624 = vpop.permute.xlu0 %623
    %v626 = vmul.f32 %v621, %v624
    %v627 = vmul.f32 %v608, %v526
    %v628 = vadd.f32 %v626, %v627
    %630 = vrot.lane.b32.xlu0 %v628, 96
    %v631 = vpop.permute.xlu0 %630
    %v632 = vsel %vm80, %v631, 0
    %634 = vmatprep.subr.mxu0 0.0
    %635 = vmatpush1.msra.mxu0 %v210
    %636 = vmatprep.subr.mxu0 0.0
    %637 = vmatpush1.msra.mxu0 %v211
    %638 = vmatprep.subr.mxu0 0.0
    %639 = vmatpush1.msra.mxu0 %v212
    %640 = vmatprep.subr.mxu0 0.0
    %641 = vmatpush1.msra.mxu0 %v213
    %642 = vmatprep.subr.mxu0 0.0
    %643 = vmatpush1.msra.mxu0 0.0
    %644 = vmatprep.subr.mxu0 0.0
    %645 = vmatpush1.msra.mxu0 0.0
    %646 = vmatprep.subr.mxu0 0.0
    %647 = vmatpush1.msra.mxu0 0.0
    %648 = vmatprep.subr.mxu0 0.0
    %649 = vmatpush1.msra.mxu0 0.0
    %650 = vmatprep.subr.mxu0 0.0
    %651 = vmatpush1.msra.mxu0 0.0
    %652 = vmatprep.subr.mxu0 0.0
    %653 = vmatpush1.msra.mxu0 0.0
    %654 = vmatprep.subr.mxu0 0.0
    %655 = vmatpush1.msra.mxu0 0.0
    %656 = vmatprep.subr.mxu0 0.0
    %657 = vmatpush1.msra.mxu0 0.0
    %658 = vmatprep.subr.mxu0 0.0
    %659 = vmatpush1.msra.mxu0 0.0
    %660 = vmatprep.subr.mxu0 0.0
    %661 = vmatpush1.msra.mxu0 0.0
    %662 = vmatprep.subr.mxu0 0.0
    %663 = vmatpush1.msra.mxu0 0.0
    %664 = vmatprep.subr.mxu0 0.0
    %665 = vmatpush1.msra.mxu0 0.0
    %666 = vmatprep.subr.mxu0 0.0
    %667 = vmatpush1.msra.mxu0 0.0
    %668 = vmatprep.subr.mxu0 0.0
    %669 = vmatpush1.msra.mxu0 0.0
    %670 = vmatprep.subr.mxu0 0.0
    %671 = vmatpush1.msra.mxu0 0.0
    %672 = vmatprep.subr.mxu0 0.0
    %673 = vmatpush1.msra.mxu0 0.0
    %674 = vmatprep.subr.mxu0 0.0
    %675 = vmatpush1.msra.mxu0 0.0
    %676 = vmatprep.subr.mxu0 0.0
    %677 = vmatpush1.msra.mxu0 0.0
    %678 = vmatprep.subr.mxu0 0.0
    %679 = vmatpush1.msra.mxu0 0.0
    %680 = vmatprep.subr.mxu0 0.0
    %681 = vmatpush1.msra.mxu0 0.0
    %682 = vmatprep.subr.mxu0 0.0
    %683 = vmatpush1.msra.mxu0 0.0
    %684 = vmatprep.subr.mxu0 0.0
    %685 = vmatpush1.msra.mxu0 0.0
    %686 = vmatprep.subr.mxu0 0.0
    %687 = vmatpush1.msra.mxu0 0.0
    %688 = vmatprep.subr.mxu0 0.0
    %689 = vmatpush1.msra.mxu0 0.0
    %690 = vmatprep.subr.mxu0 0.0
    %691 = vmatpush1.msra.mxu0 0.0
    %692 = vmatprep.subr.mxu0 0.0
    %693 = vmatpush1.msra.mxu0 0.0
    %694 = vmatprep.subr.mxu0 0.0
    %695 = vmatpush1.msra.mxu0 0.0
    %696 = vmatprep.subr.mxu0 0.0
    %697 = vmatpush1.msra.mxu0 0.0
    %698 = vmatprep.mubr.f32.mxu0 0.0
    %699 = vmatmul.mubr.f32.gmra.mrb[0].mxu0 %v632
    %v700 = vpop.f32.mrb[0].mxu0
    %v701 = vadd.f32 0.0, %v700
    %v702 = vpop.f32.mrb[0].mxu0
    %703 = vdwg.mxu0
    %v704 = vadd.f32 %v192, %v701
    %v705 = vxor.u32 %v704, 2147483648
    %v706 = vmul.f32 %v705, 1.442695
    %v707 = vpow.pop %v706
    %v708 = vadd.f32 %v707, 1.0
    %v709 = vrcp.pop %v708
    %v710 = vmul.f32 1.0, %v709
    %v711 = vadd.f32 %v701, %v301
    %713 = vrot.lane.b32.xlu0 %v711, 64
    %v714 = vpop.permute.xlu0 %713
    %v716 = vmul.f32 %v710, %v714
    %718 = vrot.lane.b32.xlu0 %v716, 64
    %v719 = vpop.permute.xlu0 %718
    %v721 = vadd.f32 %v192, %v719
    %v722 = vtanh.pop %v721
    %v723 = vsub.f32 1.0, %v710
    %725 = vrot.lane.b32.xlu0 %v722, 96
    %v726 = vpop.permute.xlu0 %725
    %v728 = vmul.f32 %v723, %v726
    %v729 = vmul.f32 %v710, %v628
    %v730 = vadd.f32 %v728, %v729
    %732 = vrot.lane.b32.xlu0 %v730, 96
    %v733 = vpop.permute.xlu0 %732
    %v734 = vsel %vm80, %v733, 0
    %736 = vmatprep.subr.mxu0 0.0
    %737 = vmatpush1.msra.mxu0 %v210
    %738 = vmatprep.subr.mxu0 0.0
    %739 = vmatpush1.msra.mxu0 %v211
    %740 = vmatprep.subr.mxu0 0.0
    %741 = vmatpush1.msra.mxu0 %v212
    %742 = vmatprep.subr.mxu0 0.0
    %743 = vmatpush1.msra.mxu0 %v213
    %744 = vmatprep.subr.mxu0 0.0
    %745 = vmatpush1.msra.mxu0 0.0
    %746 = vmatprep.subr.mxu0 0.0
    %747 = vmatpush1.msra.mxu0 0.0
    %748 = vmatprep.subr.mxu0 0.0
    %749 = vmatpush1.msra.mxu0 0.0
    %750 = vmatprep.subr.mxu0 0.0
    %751 = vmatpush1.msra.mxu0 0.0
    %752 = vmatprep.subr.mxu0 0.0
    %753 = vmatpush1.msra.mxu0 0.0
    %754 = vmatprep.subr.mxu0 0.0
    %755 = vmatpush1.msra.mxu0 0.0
    %756 = vmatprep.subr.mxu0 0.0
    %757 = vmatpush1.msra.mxu0 0.0
    %758 = vmatprep.subr.mxu0 0.0
    %759 = vmatpush1.msra.mxu0 0.0
    %760 = vmatprep.subr.mxu0 0.0
    %761 = vmatpush1.msra.mxu0 0.0
    %762 = vmatprep.subr.mxu0 0.0
    %763 = vmatpush1.msra.mxu0 0.0
    %764 = vmatprep.subr.mxu0 0.0
    %765 = vmatpush1.msra.mxu0 0.0
    %766 = vmatprep.subr.mxu0 0.0
    %767 = vmatpush1.msra.mxu0 0.0
    %768 = vmatprep.subr.mxu0 0.0
    %769 = vmatpush1.msra.mxu0 0.0
    %770 = vmatprep.subr.mxu0 0.0
    %771 = vmatpush1.msra.mxu0 0.0
    %772 = vmatprep.subr.mxu0 0.0
    %773 = vmatpush1.msra.mxu0 0.0
    %774 = vmatprep.subr.mxu0 0.0
    %775 = vmatpush1.msra.mxu0 0.0
    %776 = vmatprep.subr.mxu0 0.0
    %777 = vmatpush1.msra.mxu0 0.0
    %778 = vmatprep.subr.mxu0 0.0
    %779 = vmatpush1.msra.mxu0 0.0
    %780 = vmatprep.subr.mxu0 0.0
    %781 = vmatpush1.msra.mxu0 0.0
    %782 = vmatprep.subr.mxu0 0.0
    %783 = vmatpush1.msra.mxu0 0.0
    %784 = vmatprep.subr.mxu0 0.0
    %785 = vmatpush1.msra.mxu0 0.0
    %786 = vmatprep.subr.mxu0 0.0
    %787 = vmatpush1.msra.mxu0 0.0
    %788 = vmatprep.subr.mxu0 0.0
    %789 = vmatpush1.msra.mxu0 0.0
    %790 = vmatprep.subr.mxu0 0.0
    %791 = vmatpush1.msra.mxu0 0.0
    %792 = vmatprep.subr.mxu0 0.0
    %793 = vmatpush1.msra.mxu0 0.0
    %794 = vmatprep.subr.mxu0 0.0
    %795 = vmatpush1.msra.mxu0 0.0
    %796 = vmatprep.subr.mxu0 0.0
    %797 = vmatpush1.msra.mxu0 0.0
    %798 = vmatprep.subr.mxu0 0.0
    %799 = vmatpush1.msra.mxu0 0.0
    %800 = vmatprep.mubr.f32.mxu0 0.0
    %801 = vmatmul.mubr.f32.gmra.mrb[0].mxu0 %v734
    %v802 = vpop.f32.mrb[0].mxu0
    %v803 = vadd.f32 0.0, %v802
    %v804 = vpop.f32.mrb[0].mxu0
    %805 = vdwg.mxu0
    %v806 = vadd.f32 %v197, %v803
    %v807 = vxor.u32 %v806, 2147483648
    %v808 = vmul.f32 %v807, 1.442695
    %v809 = vpow.pop %v808
    %v810 = vadd.f32 %v809, 1.0
    %v811 = vrcp.pop %v810
    %v812 = vmul.f32 1.0, %v811
    %v813 = vadd.f32 %v803, %v301
    %815 = vrot.lane.b32.xlu0 %v813, 64
    %v816 = vpop.permute.xlu0 %815
    %v818 = vmul.f32 %v812, %v816
    %820 = vrot.lane.b32.xlu0 %v818, 64
    %v821 = vpop.permute.xlu0 %820
    %v823 = vadd.f32 %v197, %v821
    %v824 = vtanh.pop %v823
    %v825 = vsub.f32 1.0, %v812
    %827 = vrot.lane.b32.xlu0 %v824, 96
    %v828 = vpop.permute.xlu0 %827
    %v830 = vmul.f32 %v825, %v828
    %v831 = vmul.f32 %v812, %v730
    %v832 = vadd.f32 %v830, %v831
    %834 = vrot.lane.b32.xlu0 %v832, 96
    %v835 = vpop.permute.xlu0 %834
    %v836 = vsel %vm80, %v835, 0
    %838 = vmatprep.subr.mxu0 0.0
    %839 = vmatpush1.msra.mxu0 %v210
    %840 = vmatprep.subr.mxu0 0.0
    %841 = vmatpush1.msra.mxu0 %v211
    %842 = vmatprep.subr.mxu0 0.0
    %843 = vmatpush1.msra.mxu0 %v212
    %844 = vmatprep.subr.mxu0 0.0
    %845 = vmatpush1.msra.mxu0 %v213
    %846 = vmatprep.subr.mxu0 0.0
    %847 = vmatpush1.msra.mxu0 0.0
    %848 = vmatprep.subr.mxu0 0.0
    %849 = vmatpush1.msra.mxu0 0.0
    %850 = vmatprep.subr.mxu0 0.0
    %851 = vmatpush1.msra.mxu0 0.0
    %852 = vmatprep.subr.mxu0 0.0
    %853 = vmatpush1.msra.mxu0 0.0
    %854 = vmatprep.subr.mxu0 0.0
    %855 = vmatpush1.msra.mxu0 0.0
    %856 = vmatprep.subr.mxu0 0.0
    %857 = vmatpush1.msra.mxu0 0.0
    %858 = vmatprep.subr.mxu0 0.0
    %859 = vmatpush1.msra.mxu0 0.0
    %860 = vmatprep.subr.mxu0 0.0
    %861 = vmatpush1.msra.mxu0 0.0
    %862 = vmatprep.subr.mxu0 0.0
    %863 = vmatpush1.msra.mxu0 0.0
    %864 = vmatprep.subr.mxu0 0.0
    %865 = vmatpush1.msra.mxu0 0.0
    %866 = vmatprep.subr.mxu0 0.0
    %867 = vmatpush1.msra.mxu0 0.0
    %868 = vmatprep.subr.mxu0 0.0
    %869 = vmatpush1.msra.mxu0 0.0
    %870 = vmatprep.subr.mxu0 0.0
    %871 = vmatpush1.msra.mxu0 0.0
    %872 = vmatprep.subr.mxu0 0.0
    %873 = vmatpush1.msra.mxu0 0.0
    %874 = vmatprep.subr.mxu0 0.0
    %875 = vmatpush1.msra.mxu0 0.0
    %876 = vmatprep.subr.mxu0 0.0
    %877 = vmatpush1.msra.mxu0 0.0
    %878 = vmatprep.subr.mxu0 0.0
    %879 = vmatpush1.msra.mxu0 0.0
    %880 = vmatprep.subr.mxu0 0.0
    %881 = vmatpush1.msra.mxu0 0.0
    %882 = vmatprep.subr.mxu0 0.0
    %883 = vmatpush1.msra.mxu0 0.0
    %884 = vmatprep.subr.mxu0 0.0
    %885 = vmatpush1.msra.mxu0 0.0
    %886 = vmatprep.subr.mxu0 0.0
    %887 = vmatpush1.msra.mxu0 0.0
    %888 = vmatprep.subr.mxu0 0.0
    %889 = vmatpush1.msra.mxu0 0.0
    %890 = vmatprep.subr.mxu0 0.0
    %891 = vmatpush1.msra.mxu0 0.0
    %892 = vmatprep.subr.mxu0 0.0
    %893 = vmatpush1.msra.mxu0 0.0
    %894 = vmatprep.subr.mxu0 0.0
    %895 = vmatpush1.msra.mxu0 0.0
    %896 = vmatprep.subr.mxu0 0.0
    %897 = vmatpush1.msra.mxu0 0.0
    %898 = vmatprep.subr.mxu0 0.0
    %899 = vmatpush1.msra.mxu0 0.0
    %900 = vmatprep.subr.mxu0 0.0
    %901 = vmatpush1.msra.mxu0 0.0
    %902 = vmatprep.mubr.f32.mxu0 0.0
    %903 = vmatmul.mubr.f32.gmra.mrb[0].mxu0 %v836
    %v904 = vpop.f32.mrb[0].mxu0
    %v905 = vadd.f32 0.0, %v904
    %v906 = vpop.f32.mrb[0].mxu0
    %907 = vdwg.mxu0
    %v908 = vadd.f32 %v202, %v905
    %v909 = vxor.u32 %v908, 2147483648
    %v910 = vmul.f32 %v909, 1.442695
    %v911 = vpow.pop %v910
    %v912 = vadd.f32 %v911, 1.0
    %v913 = vrcp.pop %v912
    %v914 = vmul.f32 1.0, %v913
    %v915 = vadd.f32 %v905, %v301
    %917 = vrot.lane.b32.xlu0 %v915, 64
    %v918 = vpop.permute.xlu0 %917
    %v920 = vmul.f32 %v914, %v918
    %922 = vrot.lane.b32.xlu0 %v920, 64
    %v923 = vpop.permute.xlu0 %922
    %v925 = vadd.f32 %v202, %v923
    %v926 = vtanh.pop %v925
    %v927 = vsub.f32 1.0, %v914
    %929 = vrot.lane.b32.xlu0 %v926, 96
    %v930 = vpop.permute.xlu0 %929
    %v932 = vmul.f32 %v927, %v930
    %v933 = vmul.f32 %v914, %v832
    %v934 = vadd.f32 %v932, %v933
    %936 = vrot.lane.b32.xlu0 %v934, 96
    %v937 = vpop.permute.xlu0 %936
    %v938 = vsel %vm80, %v937, 0
    %940 = vmatprep.subr.mxu0 0.0
    %941 = vmatpush1.msra.mxu0 %v210
    %942 = vmatprep.subr.mxu0 0.0
    %943 = vmatpush1.msra.mxu0 %v211
    %944 = vmatprep.subr.mxu0 0.0
    %945 = vmatpush1.msra.mxu0 %v212
    %946 = vmatprep.subr.mxu0 0.0
    %947 = vmatpush1.msra.mxu0 %v213
    %948 = vmatprep.subr.mxu0 0.0
    %949 = vmatpush1.msra.mxu0 0.0
    %950 = vmatprep.subr.mxu0 0.0
    %951 = vmatpush1.msra.mxu0 0.0
    %952 = vmatprep.subr.mxu0 0.0
    %953 = vmatpush1.msra.mxu0 0.0
    %954 = vmatprep.subr.mxu0 0.0
    %955 = vmatpush1.msra.mxu0 0.0
    %956 = vmatprep.subr.mxu0 0.0
    %957 = vmatpush1.msra.mxu0 0.0
    %958 = vmatprep.subr.mxu0 0.0
    %959 = vmatpush1.msra.mxu0 0.0
    %960 = vmatprep.subr.mxu0 0.0
    %961 = vmatpush1.msra.mxu0 0.0
    %962 = vmatprep.subr.mxu0 0.0
    %963 = vmatpush1.msra.mxu0 0.0
    %964 = vmatprep.subr.mxu0 0.0
    %965 = vmatpush1.msra.mxu0 0.0
    %966 = vmatprep.subr.mxu0 0.0
    %967 = vmatpush1.msra.mxu0 0.0
    %968 = vmatprep.subr.mxu0 0.0
    %969 = vmatpush1.msra.mxu0 0.0
    %970 = vmatprep.subr.mxu0 0.0
    %971 = vmatpush1.msra.mxu0 0.0
    %972 = vmatprep.subr.mxu0 0.0
    %973 = vmatpush1.msra.mxu0 0.0
    %974 = vmatprep.subr.mxu0 0.0
    %975 = vmatpush1.msra.mxu0 0.0
    %976 = vmatprep.subr.mxu0 0.0
    %977 = vmatpush1.msra.mxu0 0.0
    %978 = vmatprep.subr.mxu0 0.0
    %979 = vmatpush1.msra.mxu0 0.0
    %980 = vmatprep.subr.mxu0 0.0
    %981 = vmatpush1.msra.mxu0 0.0
    %982 = vmatprep.subr.mxu0 0.0
    %983 = vmatpush1.msra.mxu0 0.0
    %984 = vmatprep.subr.mxu0 0.0
    %985 = vmatpush1.msra.mxu0 0.0
    %986 = vmatprep.subr.mxu0 0.0
    %987 = vmatpush1.msra.mxu0 0.0
    %988 = vmatprep.subr.mxu0 0.0
    %989 = vmatpush1.msra.mxu0 0.0
    %990 = vmatprep.subr.mxu0 0.0
    %991 = vmatpush1.msra.mxu0 0.0
    %992 = vmatprep.subr.mxu0 0.0
    %993 = vmatpush1.msra.mxu0 0.0
    %994 = vmatprep.subr.mxu0 0.0
    %995 = vmatpush1.msra.mxu0 0.0
    %996 = vmatprep.subr.mxu0 0.0
    %997 = vmatpush1.msra.mxu0 0.0
    %998 = vmatprep.subr.mxu0 0.0
    %999 = vmatpush1.msra.mxu0 0.0
    %1000 = vmatprep.subr.mxu0 0.0
    %1001 = vmatpush1.msra.mxu0 0.0
    %1002 = vmatprep.subr.mxu0 0.0
    %1003 = vmatpush1.msra.mxu0 0.0
    %1004 = vmatprep.mubr.f32.mxu0 0.0
    %1005 = vmatmul.mubr.f32.gmra.mrb[0].mxu0 %v938
    %v1006 = vpop.f32.mrb[0].mxu0
    %v1007 = vadd.f32 0.0, %v1006
    %v1008 = vpop.f32.mrb[0].mxu0
    %1009 = vdwg.mxu0
    %v1010 = vadd.f32 %v207, %v1007
    %v1011 = vxor.u32 %v1010, 2147483648
    %v1012 = vmul.f32 %v1011, 1.442695
    %v1013 = vpow.pop %v1012
    %v1014 = vadd.f32 %v1013, 1.0
    %v1015 = vrcp.pop %v1014
    %v1016 = vmul.f32 1.0, %v1015
    %v1017 = vadd.f32 %v1007, %v301
    %1019 = vrot.lane.b32.xlu0 %v1017, 64
    %v1020 = vpop.permute.xlu0 %1019
    %v1022 = vmul.f32 %v1016, %v1020
    %1024 = vrot.lane.b32.xlu0 %v1022, 64
    %v1025 = vpop.permute.xlu0 %1024
    %v1027 = vadd.f32 %v207, %v1025
    %v1028 = vtanh.pop %v1027
    %v1029 = vsub.f32 1.0, %v1016
    %1031 = vrot.lane.b32.xlu0 %v1028, 96
    %v1032 = vpop.permute.xlu0 %1031
    %v1034 = vmul.f32 %v1029, %v1032
    %v1035 = vmul.f32 %v1016, %v934
    %v1036 = vadd.f32 %v1034, %v1035
    %v1037 = vld [vmem:[%s5] sm:$0xff]
    %v1038 = vld [vmem:[%s5 + $0x8] sm:$0xff]
    %v1039 = vld [vmem:[%s5 + $0x10] sm:$0xff]
    %v1040 = vld [vmem:[%s5 + $0x18] sm:$0xff]
    %v1041 = vld [vmem:[%s6] sm:$0x1]
    %v1043 = vlaneseq
    %v1044 = vshrl.u32 %v1043, 7
    %v1045 = vsub.s32 0, %v1044
    %v1046 = vrot.slane %v1041, %v1045
    %1049 = vrot.lane.b32.xlu0 %v1036, 96
    %v1050 = vpop.permute.xlu0 %1049
    %v1051 = vsel %vm80, %v1050, 0
    %1053 = vmatprep.subr.mxu0 0.0
    %1054 = vmatpush1.msra.mxu0 %v1037
    %1055 = vmatprep.subr.mxu0 0.0
    %1056 = vmatpush1.msra.mxu0 %v1038
    %1057 = vmatprep.subr.mxu0 0.0
    %1058 = vmatpush1.msra.mxu0 %v1039
    %1059 = vmatprep.subr.mxu0 0.0
    %1060 = vmatpush1.msra.mxu0 %v1040
    %1061 = vmatprep.subr.mxu0 0.0
    %1062 = vmatpush1.msra.mxu0 0.0
    %1063 = vmatprep.subr.mxu0 0.0
    %1064 = vmatpush1.msra.mxu0 0.0
    %1065 = vmatprep.subr.mxu0 0.0
    %1066 = vmatpush1.msra.mxu0 0.0
    %1067 = vmatprep.subr.mxu0 0.0
    %1068 = vmatpush1.msra.mxu0 0.0
    %1069 = vmatprep.subr.mxu0 0.0
    %1070 = vmatpush1.msra.mxu0 0.0
    %1071 = vmatprep.subr.mxu0 0.0
    %1072 = vmatpush1.msra.mxu0 0.0
    %1073 = vmatprep.subr.mxu0 0.0
    %1074 = vmatpush1.msra.mxu0 0.0
    %1075 = vmatprep.subr.mxu0 0.0
    %1076 = vmatpush1.msra.mxu0 0.0
    %1077 = vmatprep.subr.mxu0 0.0
    %1078 = vmatpush1.msra.mxu0 0.0
    %1079 = vmatprep.subr.mxu0 0.0
    %1080 = vmatpush1.msra.mxu0 0.0
    %1081 = vmatprep.subr.mxu0 0.0
    %1082 = vmatpush1.msra.mxu0 0.0
    %1083 = vmatprep.subr.mxu0 0.0
    %1084 = vmatpush1.msra.mxu0 0.0
    %1085 = vmatprep.subr.mxu0 0.0
    %1086 = vmatpush1.msra.mxu0 0.0
    %1087 = vmatprep.subr.mxu0 0.0
    %1088 = vmatpush1.msra.mxu0 0.0
    %1089 = vmatprep.subr.mxu0 0.0
    %1090 = vmatpush1.msra.mxu0 0.0
    %1091 = vmatprep.subr.mxu0 0.0
    %1092 = vmatpush1.msra.mxu0 0.0
    %1093 = vmatprep.subr.mxu0 0.0
    %1094 = vmatpush1.msra.mxu0 0.0
    %1095 = vmatprep.subr.mxu0 0.0
    %1096 = vmatpush1.msra.mxu0 0.0
    %1097 = vmatprep.subr.mxu0 0.0
    %1098 = vmatpush1.msra.mxu0 0.0
    %1099 = vmatprep.subr.mxu0 0.0
    %1100 = vmatpush1.msra.mxu0 0.0
    %1101 = vmatprep.subr.mxu0 0.0
    %1102 = vmatpush1.msra.mxu0 0.0
    %1103 = vmatprep.subr.mxu0 0.0
    %1104 = vmatpush1.msra.mxu0 0.0
    %1105 = vmatprep.subr.mxu0 0.0
    %1106 = vmatpush1.msra.mxu0 0.0
    %1107 = vmatprep.subr.mxu0 0.0
    %1108 = vmatpush1.msra.mxu0 0.0
    %1109 = vmatprep.subr.mxu0 0.0
    %1110 = vmatpush1.msra.mxu0 0.0
    %1111 = vmatprep.subr.mxu0 0.0
    %1112 = vmatpush1.msra.mxu0 0.0
    %1113 = vmatprep.subr.mxu0 0.0
    %1114 = vmatpush1.msra.mxu0 0.0
    %1115 = vmatprep.subr.mxu0 0.0
    %1116 = vmatpush1.msra.mxu0 0.0
    %1117 = vmatprep.mubr.f32.mxu0 0.0
    %1118 = vmatmul.mubr.f32.gmra.mrb[0].mxu0 %v326
    %v1119 = vpop.f32.mrb[0].mxu0
    %v1120 = vadd.f32 %v1046, %v1119
    %v1121 = vpop.f32.mrb[0].mxu0
    %1122 = vmatprep.mubr.f32.mxu0 0.0
    %1123 = vmatmul.mubr.f32.gmra.mrb[0].mxu0 %v428
    %v1124 = vpop.f32.mrb[0].mxu0
    %v1125 = vadd.f32 %v1046, %v1124
    %v1126 = vpop.f32.mrb[0].mxu0
    %1127 = vmatprep.mubr.f32.mxu0 0.0
    %1128 = vmatmul.mubr.f32.gmra.mrb[0].mxu0 %v530
    %v1129 = vpop.f32.mrb[0].mxu0
    %v1130 = vadd.f32 %v1046, %v1129
    %v1131 = vpop.f32.mrb[0].mxu0
    %1132 = vmatprep.mubr.f32.mxu0 0.0
    %1133 = vmatmul.mubr.f32.gmra.mrb[0].mxu0 %v632
    %v1134 = vpop.f32.mrb[0].mxu0
    %v1135 = vadd.f32 %v1046, %v1134
    %v1136 = vpop.f32.mrb[0].mxu0
    %1137 = vmatprep.mubr.f32.mxu0 0.0
    %1138 = vmatmul.mubr.f32.gmra.mrb[0].mxu0 %v734
    %v1139 = vpop.f32.mrb[0].mxu0
    %v1140 = vadd.f32 %v1046, %v1139
    %v1141 = vpop.f32.mrb[0].mxu0
    %1142 = vmatprep.mubr.f32.mxu0 0.0
    %1143 = vmatmul.mubr.f32.gmra.mrb[0].mxu0 %v836
    %v1144 = vpop.f32.mrb[0].mxu0
    %v1145 = vadd.f32 %v1046, %v1144
    %v1146 = vpop.f32.mrb[0].mxu0
    %1147 = vmatprep.mubr.f32.mxu0 0.0
    %1148 = vmatmul.mubr.f32.gmra.mrb[0].mxu0 %v938
    %v1149 = vpop.f32.mrb[0].mxu0
    %v1150 = vadd.f32 %v1046, %v1149
    %v1151 = vpop.f32.mrb[0].mxu0
    %1152 = vmatprep.mubr.f32.mxu0 0.0
    %1153 = vmatmul.mubr.f32.gmra.mrb[0].mxu0 %v1051
    %v1154 = vpop.f32.mrb[0].mxu0
    %v1155 = vadd.f32 %v1046, %v1154
    %v1156 = vpop.f32.mrb[0].mxu0
    %1157 = vdwg.mxu0
    %v1158 = vtanh.pop %v1120
    %v1159 = vtanh.pop %v1125
    %v1160 = vtanh.pop %v1130
    %v1161 = vtanh.pop %v1135
    %v1162 = vtanh.pop %v1140
    %v1163 = vtanh.pop %v1145
    %v1164 = vtanh.pop %v1150
    %v1165 = vtanh.pop %v1155
    %v1166 = vmul.f32 %v1158, %v61
    %v1167 = vmul.f32 %v1159, %v62
    %v1168 = vmul.f32 %v1160, %v63
    %v1169 = vmul.f32 %v1161, %v64
    %v1170 = vmul.f32 %v1162, %v65
    %v1171 = vmul.f32 %v1163, %v66
    %v1172 = vmul.f32 %v1164, %v67
    %v1173 = vmul.f32 %v1165, %v68
    %v1174 = vsel %vm80, %v1166, 0.0
    %v1175 = vsel %vm80, %v1167, 0.0
    %v1176 = vadd.f32 %v1174, %v1175
    %v1177 = vsel %vm80, %v1168, 0.0
    %v1178 = vadd.f32 %v1176, %v1177
    %v1179 = vsel %vm80, %v1169, 0.0
    %v1180 = vadd.f32 %v1178, %v1179
    %v1181 = vsel %vm80, %v1170, 0.0
    %v1182 = vadd.f32 %v1180, %v1181
    %v1183 = vsel %vm80, %v1171, 0.0
    %v1184 = vadd.f32 %v1182, %v1183
    %v1185 = vsel %vm80, %v1172, 0.0
    %v1186 = vadd.f32 %v1184, %v1185
    %v1187 = vsel %vm80, %v1173, 0.0
    %v1188 = vadd.f32 %v1186, %v1187
    %v1189 = vld [vmem:[%s7] sm:$0xff]
    %v1190 = vld [vmem:[%s7 + $0x8] sm:$0xff]
    %v1191 = vld [vmem:[%s7 + $0x10] sm:$0xff]
    %v1192 = vld [vmem:[%s7 + $0x18] sm:$0xff]
    %v1193 = vld [vmem:[%s8] sm:$0x1]
    %v1195 = vlaneseq
    %v1196 = vshrl.u32 %v1195, 7
    %v1197 = vsub.s32 0, %v1196
    %v1198 = vrot.slane %v1193, %v1197
    %v1201 = vsel %vm80, %v1188, 0
    %1203 = vmatprep.subr.mxu0 0.0
    %1204 = vmatpush1.msra.mxu0 %v1189
    %1205 = vmatprep.subr.mxu0 0.0
    %1206 = vmatpush1.msra.mxu0 %v1190
    %1207 = vmatprep.subr.mxu0 0.0
    %1208 = vmatpush1.msra.mxu0 %v1191
    %1209 = vmatprep.subr.mxu0 0.0
    %1210 = vmatpush1.msra.mxu0 %v1192
    %1211 = vmatprep.subr.mxu0 0.0
    %1212 = vmatpush1.msra.mxu0 0.0
    %1213 = vmatprep.subr.mxu0 0.0
    %1214 = vmatpush1.msra.mxu0 0.0
    %1215 = vmatprep.subr.mxu0 0.0
    %1216 = vmatpush1.msra.mxu0 0.0
    %1217 = vmatprep.subr.mxu0 0.0
    %1218 = vmatpush1.msra.mxu0 0.0
    %1219 = vmatprep.subr.mxu0 0.0
    %1220 = vmatpush1.msra.mxu0 0.0
    %1221 = vmatprep.subr.mxu0 0.0
    %1222 = vmatpush1.msra.mxu0 0.0
    %1223 = vmatprep.subr.mxu0 0.0
    %1224 = vmatpush1.msra.mxu0 0.0
    %1225 = vmatprep.subr.mxu0 0.0
    %1226 = vmatpush1.msra.mxu0 0.0
    %1227 = vmatprep.subr.mxu0 0.0
    %1228 = vmatpush1.msra.mxu0 0.0
    %1229 = vmatprep.subr.mxu0 0.0
    %1230 = vmatpush1.msra.mxu0 0.0
    %1231 = vmatprep.subr.mxu0 0.0
    %1232 = vmatpush1.msra.mxu0 0.0
    %1233 = vmatprep.subr.mxu0 0.0
    %1234 = vmatpush1.msra.mxu0 0.0
    %1235 = vmatprep.subr.mxu0 0.0
    %1236 = vmatpush1.msra.mxu0 0.0
    %1237 = vmatprep.subr.mxu0 0.0
    %1238 = vmatpush1.msra.mxu0 0.0
    %1239 = vmatprep.subr.mxu0 0.0
    %1240 = vmatpush1.msra.mxu0 0.0
    %1241 = vmatprep.subr.mxu0 0.0
    %1242 = vmatpush1.msra.mxu0 0.0
    %1243 = vmatprep.subr.mxu0 0.0
    %1244 = vmatpush1.msra.mxu0 0.0
    %1245 = vmatprep.subr.mxu0 0.0
    %1246 = vmatpush1.msra.mxu0 0.0
    %1247 = vmatprep.subr.mxu0 0.0
    %1248 = vmatpush1.msra.mxu0 0.0
    %1249 = vmatprep.subr.mxu0 0.0
    %1250 = vmatpush1.msra.mxu0 0.0
    %1251 = vmatprep.subr.mxu0 0.0
    %1252 = vmatpush1.msra.mxu0 0.0
    %1253 = vmatprep.subr.mxu0 0.0
    %1254 = vmatpush1.msra.mxu0 0.0
    %1255 = vmatprep.subr.mxu0 0.0
    %1256 = vmatpush1.msra.mxu0 0.0
    %1257 = vmatprep.subr.mxu0 0.0
    %1258 = vmatpush1.msra.mxu0 0.0
    %1259 = vmatprep.subr.mxu0 0.0
    %1260 = vmatpush1.msra.mxu0 0.0
    %1261 = vmatprep.subr.mxu0 0.0
    %1262 = vmatpush1.msra.mxu0 0.0
    %1263 = vmatprep.subr.mxu0 0.0
    %1264 = vmatpush1.msra.mxu0 0.0
    %1265 = vmatprep.subr.mxu0 0.0
    %1266 = vmatpush1.msra.mxu0 0.0
    %1267 = vmatprep.mubr.f32.mxu0 0.0
    %1268 = vmatmul.mubr.f32.gmra.mrb[0].mxu0 %v1201
    %v1269 = vpop.f32.mrb[0].mxu0
    %v1270 = vadd.f32 %v1198, %v1269
    %v1271 = vpop.f32.mrb[0].mxu0
    %1272 = vdwg.mxu0
    %vm1273 = vcmask 130048
    %1274 = vst.msk [vmem:[#allocation7] sm:$0xff] %vm1273, %v1270
    // Predicated region
    $region46: #{tpu_custom_call.1} parent=1 // pred_check
      _
    $region47: #{tpu_custom_call.1} parent=1 // pred_check_branch
      %1276 = sbr.rel (0) target = $region49
    $region48: #{tpu_custom_call.1} parent=1 // pred_region
      %s1278 = ssub.s32 128, 128
      %1279 = vsyncadd [#allocation4], %s1278
      %s1281 = sshll.u32 [#allocation7], 4
      %s1282 = int_to_ptr.vmem [resolvable:$true] %s1281
      %1284 = dma.vmem_to_hbm [thread:$0]  %s1282, 128, %s9, [#allocation4]
    $region49: #{tpu_custom_call.1} parent=1 // pred_fallthru
      _
    // Predicated region
    $region50: #{tpu_custom_call.1} parent=1 // pred_check
      _
    $region51: #{tpu_custom_call.1} parent=1 // pred_check_branch
      %1286 = sbr.rel (0) target = $region53
    $region52: #{tpu_custom_call.1} parent=1 // pred_region
      %1287 = dma.done [#allocation4], 128
    $region53: #{tpu_custom_call.1} parent=1 // pred_fallthru
      _
    %1288 = vsyncpa [#allocation3], 1
    %1289 = vsyncpa [#allocation6], 1
    %1290 = vsyncpa [#allocation4], 1

</llo_original>
